<compile_context>
chip_gen: v7x
topology: tpu7x:2x2x1
jax: 0.10.0
libtpu: 0.0.40
codegen_flags: <defaults>
</compile_context>

<pallas_src>
import jax
import jax.numpy as jnp
from jax import lax
from jax.experimental import pallas as pl
from jax.experimental.pallas import tpu as pltpu


def _mha_flash_kernel(xq_ref, xkv_ref, wq_ref, wkv_ref, o_ref,
                      q_sc, m_sc, l_sc, acc_sc):
    """One grid step = one (batch, q-tile, kv-tile) triple, all heads at once.

    xq_ref  : (1, tq, h)   x rows for this q tile (resident across kv steps)
    xkv_ref : (1, tk, h)   x rows for this kv tile
    wq_ref  : (h, h)       Q weight, already transposed (x @ wq == nn.Linear)
    wkv_ref : (h, 2h)      fused [K | V] weights, already transposed
    o_ref   : (1, tq, h)   hidden-major output tile (written at last kv step)
    q_sc    : (tq, h)      cached Q projection for this q tile (compute dtype)
    m_sc    : (n, tq, 1)   per-head running max (f32)
    l_sc    : (n, tq, 1)   per-head running denominator (f32)
    acc_sc  : (n, tq, d)   per-head running numerator (f32)
    """
    n_heads = acc_sc.shape[0]
    d = acc_sc.shape[-1]
    h = q_sc.shape[-1]
    cd = xq_ref.dtype                      # MXU operand dtype (bf16 stays bf16)

    ki = pl.program_id(2)

    @pl.when(ki == 0)
    def _init():
        # Q projection once per q tile; reset online-softmax state.
        q_sc[...] = jnp.dot(xq_ref[0], wq_ref[...],
                            preferred_element_type=jnp.float32).astype(cd)
        m_sc[...] = jnp.full(m_sc.shape, -jnp.inf, dtype=m_sc.dtype)
        l_sc[...] = jnp.zeros(l_sc.shape, dtype=l_sc.dtype)
        acc_sc[...] = jnp.zeros(acc_sc.shape, dtype=acc_sc.dtype)

    # Fused K|V projection for this kv tile: one lane-dense MXU pass (N = 2h).
    kv = jnp.dot(xkv_ref[0], wkv_ref[...],
                 preferred_element_type=jnp.float32)                # (tk, 2h)
    k = kv[:, :h].astype(cd)                                        # (tk, h)
    v = kv[:, h:].astype(cd)                                        # (tk, h)

    # Per-head online softmax (static unroll; n_heads is small & static).
    for hd in range(n_heads):
        q_h = q_sc[:, hd * d:(hd + 1) * d]                          # (tq, d)
        k_h = k[:, hd * d:(hd + 1) * d]                             # (tk, d)
        v_h = v[:, hd * d:(hd + 1) * d]                             # (tk, d)

        # score = q @ k^T: contract feature dim of both operands (no transpose).
        s_h = lax.dot_general(q_h, k_h, (((1,), (1,)), ((), ())),
                              preferred_element_type=jnp.float32)   # (tq, tk)

        m_prev = m_sc[hd]                                           # (tq, 1)
        m_new = jnp.maximum(m_prev, jnp.max(s_h, axis=-1, keepdims=True))
        alpha = jnp.exp(m_prev - m_new)                             # (tq, 1)
        p = jnp.exp(s_h - m_new)                                    # (tq, tk)

        l_sc[hd] = alpha * l_sc[hd] + jnp.sum(p, axis=-1, keepdims=True)
        # Unnormalized PV matmul; the single normalization happens at the end.
        acc_sc[hd] = alpha * acc_sc[hd] + jnp.dot(
            p.astype(cd), v_h, preferred_element_type=jnp.float32)  # (tq, d)
        m_sc[hd] = m_new

    @pl.when(ki == pl.num_programs(2) - 1)
    def _finalize():
        inv_l = pl.reciprocal(l_sc[...], approx=True)               # (n, tq, 1)
        out = acc_sc[...] * inv_l                                   # (n, tq, d)
        # Assemble hidden-major (tq, h) and do one full-lane store.
        o_ref[0] = jnp.concatenate(
            [out[hd] for hd in range(n_heads)], axis=-1).astype(o_ref.dtype)


def _pick_tile(n, target):
    """Largest tile <= target that is a multiple of 8 and divides n, else n."""
    if n <= target:
        return n
    t = target - (target % 8)
    while t >= 8:
        if n % t == 0:
            return t
        t -= 8
    return n


def multi_head_attention(x, wq, wk, wv, *, n_heads, q_block=256, kv_block=256):
    """x: (b, s, h); wq/wk/wv in PyTorch Linear layout (out_features, in_features)."""
    b, s, h = x.shape
    assert h % n_heads == 0
    d = h // n_heads

    tq = _pick_tile(s, q_block)
    tk = _pick_tile(s, kv_block)
    n_q, n_kv = s // tq, s // tk

    # nn.Linear computes x @ W.T — pre-transpose once and fuse K|V columns.
    wq_t = wq.T.astype(x.dtype)                                     # (h, h)
    wkv_t = jnp.concatenate([wk.T, wv.T], axis=-1).astype(x.dtype)  # (h, 2h)

    # VMEM budget from the actual live set (double-buffered x/out blocks,
    # resident weights, scratch, f32 intermediates), floored at 32 MiB.
    isz = jnp.dtype(x.dtype).itemsize
    live = (2 * (tq * h + tk * h + tq * h) * isz          # xq, xkv, out (x2 buf)
            + 2 * (h * h + 2 * h * h) * isz               # wq, wkv
            + tq * h * isz                                # q scratch
            + n_heads * tq * (2 + d) * 4                  # m, l, acc (f32)
            + (tk * 2 * h + 2 * tq * tk) * 4)             # kv / score temporaries
    vmem_limit = int(min(max(2 * live, 32 << 20), 100 << 20))

    return pl.pallas_call(
        _mha_flash_kernel,
        out_shape=jax.ShapeDtypeStruct((b, s, h), x.dtype),
        grid_spec=pltpu.PrefetchScalarGridSpec(
            num_scalar_prefetch=0,
            grid=(b, n_q, n_kv),                    # kv (reduction) innermost
            in_specs=[
                pl.BlockSpec((1, tq, h), lambda bi, qi, ki: (bi, qi, 0)),   # x (q rows)
                pl.BlockSpec((1, tk, h), lambda bi, qi, ki: (bi, ki, 0)),   # x (kv rows)
                pl.BlockSpec((h, h), lambda bi, qi, ki: (0, 0)),            # Wq (resident)
                pl.BlockSpec((h, 2 * h), lambda bi, qi, ki: (0, 0)),        # [Wk|Wv] (resident)
            ],
            out_specs=pl.BlockSpec((1, tq, h), lambda bi, qi, ki: (bi, qi, 0)),
            scratch_shapes=[
                pltpu.VMEM((tq, h), x.dtype),                      # cached Q
                pltpu.VMEM((n_heads, tq, 1), jnp.float32),         # m
                pltpu.VMEM((n_heads, tq, 1), jnp.float32),         # l
                pltpu.VMEM((n_heads, tq, d), jnp.float32),         # acc
            ],
        ),
        compiler_params=pltpu.CompilerParams(
            dimension_semantics=("parallel", "parallel", "arbitrary"),
            vmem_limit_bytes=vmem_limit,
        ),
    )(x, x, wq_t, wkv_t)


def _reference(x, wq, wk, wv, n_heads):
    """Pure-JAX mirror of the PyTorch forward."""
    b, s, h = x.shape
    d = h // n_heads
    q = (x @ wq.T).reshape(b, s, n_heads, d).transpose(0, 2, 1, 3)
    k = (x @ wk.T).reshape(b, s, n_heads, d).transpose(0, 2, 1, 3)
    v = (x @ wv.T).reshape(b, s, n_heads, d).transpose(0, 2, 1, 3)
    score = jnp.einsum("bnsd,bntd->bnst", q, k)
    prob = jax.nn.softmax(score, axis=-1)
    attn = jnp.einsum("bnst,bntd->bnsd", prob, v)
    return attn.transpose(0, 2, 1, 3).reshape(b, s, h)


if __name__ == "__main__":
    batch, seq, hidden, n_heads = 2, 8, 32, 4

    key = jax.random.PRNGKey(0)
    kx, kq, kk, kv = jax.random.split(key, 4)

    x = jax.random.normal(kx, (batch, seq, hidden), dtype=jnp.float32)
    # Deterministic "Linear" weights, PyTorch layout (out_features, in_features).
    scale = 1.0 / jnp.sqrt(hidden)
    wq = jax.random.uniform(kq, (hidden, hidden), jnp.float32, -scale, scale)
    wk = jax.random.uniform(kk, (hidden, hidden), jnp.float32, -scale, scale)
    wv = jax.random.uniform(kv, (hidden, hidden), jnp.float32, -scale, scale)

    out = multi_head_attention(x, wq, wk, wv, n_heads=n_heads)
    out = jax.block_until_ready(out)

    ref = _reference(x, wq, wk, wv, n_heads)
    assert out.shape == (batch, seq, hidden)
    # Tolerance loosened from 1e-5: pl.reciprocal(approx=True) + post-matmul
    # normalization slightly perturb the attention-weight rounding.
    assert jnp.allclose(out, ref, atol=1e-2, rtol=1e-2), "mismatch vs reference"

    print("KERNEL_OK")
</pallas_src>

<mosaic_0001>
module attributes {stable_mosaic.version = 11 : i64} {
  func.func @_mha_flash_kernel(%arg0: i32, %arg1: i32, %arg2: i32, %arg3: memref<1x8x32xf32, #tpu.memory_space<vmem>>, %arg4: memref<1x8x32xf32, #tpu.memory_space<vmem>>, %arg5: memref<32x32xf32, #tpu.memory_space<vmem>>, %arg6: memref<32x64xf32, #tpu.memory_space<vmem>>, %arg7: memref<1x8x32xf32, #tpu.memory_space<vmem>>, %arg8: memref<8x32xf32, #tpu.memory_space<vmem>>, %arg9: memref<4x8x1xf32, #tpu.memory_space<vmem>>, %arg10: memref<4x8x1xf32, #tpu.memory_space<vmem>>, %arg11: memref<4x8x8xf32, #tpu.memory_space<vmem>>) attributes {dimension_semantics = [#tpu.dimension_semantics<parallel>, #tpu.dimension_semantics<parallel>, #tpu.dimension_semantics<arbitrary>], iteration_bounds = array<i64: 2, 1, 1>, scalar_prefetch = 0 : i64, scratch_operands = 4 : i64, tpu.core_type = #tpu.core_type<tc>, window_params = [{transform_indices = @transform_0, window_bounds = array<i64: 1, 8, 32>}, {transform_indices = @transform_1, window_bounds = array<i64: 1, 8, 32>}, {pipeline_mode = #tpu.pipeline_mode<synchronous>, transform_indices = @transform_2, window_bounds = array<i64: 32, 32>}, {pipeline_mode = #tpu.pipeline_mode<synchronous>, transform_indices = @transform_3, window_bounds = array<i64: 32, 64>}, {transform_indices = @transform_4, window_bounds = array<i64: 1, 8, 32>}]} {
    %c0_i32 = arith.constant 0 : i32
    %0 = arith.cmpi eq, %arg2, %c0_i32 : i32
    %1 = arith.extui %0 : i1 to i32
    %c0_i32_0 = arith.constant 0 : i32
    %2 = arith.cmpi ne, %1, %c0_i32_0 : i32
    scf.if %2 {
      %c0_97 = arith.constant 0 : index
      %c0_98 = arith.constant 0 : index
      %c0_99 = arith.constant 0 : index
      %152 = vector.load %arg3[%c0_97, %c0_98, %c0_99] : memref<1x8x32xf32, #tpu.memory_space<vmem>>, vector<1x8x32xf32>
      %153 = vector.shape_cast %152 : vector<1x8x32xf32> to vector<8x32xf32>
      %c0_100 = arith.constant 0 : index
      %c0_101 = arith.constant 0 : index
      %154 = vector.load %arg5[%c0_100, %c0_101] : memref<32x32xf32, #tpu.memory_space<vmem>>, vector<32x32xf32>
      %cst_102 = arith.constant dense<0.000000e+00> : vector<8x32xf32>
      %155 = tpu.matmul %153, %154, %cst_102 {dimension_numbers = #tpu.dot_dimension_numbers<[1], [0], [0], [1], [0, 0, 1, 1], [], []>} : vector<8x32xf32>, vector<32x32xf32>, vector<8x32xf32> -> vector<8x32xf32>
      %c0_103 = arith.constant 0 : index
      %c0_104 = arith.constant 0 : index
      %156 = vector.load %arg8[%c0_103, %c0_104] : memref<8x32xf32, #tpu.memory_space<vmem>>, vector<8x32xf32>
      tpu.vector_store %arg8[%c0_103, %c0_104], %155 {strides = array<i32>} : memref<8x32xf32, #tpu.memory_space<vmem>>, vector<8x32xf32>,
      %cst_105 = arith.constant 0xFF800000 : f32
      %157 = vector.broadcast %cst_105 : f32 to vector<4x8x1xf32>
      %c0_106 = arith.constant 0 : index
      %c0_107 = arith.constant 0 : index
      %c0_108 = arith.constant 0 : index
      %158 = vector.load %arg9[%c0_106, %c0_107, %c0_108] : memref<4x8x1xf32, #tpu.memory_space<vmem>>, vector<4x8x1xf32>
      tpu.vector_store %arg9[%c0_106, %c0_107, %c0_108], %157 {strides = array<i32>} : memref<4x8x1xf32, #tpu.memory_space<vmem>>, vector<4x8x1xf32>,
      %cst_109 = arith.constant 0.000000e+00 : f32
      %159 = vector.broadcast %cst_109 : f32 to vector<4x8x1xf32>
      %c0_110 = arith.constant 0 : index
      %c0_111 = arith.constant 0 : index
      %c0_112 = arith.constant 0 : index
      %160 = vector.load %arg10[%c0_110, %c0_111, %c0_112] : memref<4x8x1xf32, #tpu.memory_space<vmem>>, vector<4x8x1xf32>
      tpu.vector_store %arg10[%c0_110, %c0_111, %c0_112], %159 {strides = array<i32>} : memref<4x8x1xf32, #tpu.memory_space<vmem>>, vector<4x8x1xf32>,
      %cst_113 = arith.constant 0.000000e+00 : f32
      %161 = vector.broadcast %cst_113 : f32 to vector<4x8x8xf32>
      %c0_114 = arith.constant 0 : index
      %c0_115 = arith.constant 0 : index
      %c0_116 = arith.constant 0 : index
      %162 = vector.load %arg11[%c0_114, %c0_115, %c0_116] : memref<4x8x8xf32, #tpu.memory_space<vmem>>, vector<4x8x8xf32>
      tpu.vector_store %arg11[%c0_114, %c0_115, %c0_116], %161 {strides = array<i32>} : memref<4x8x8xf32, #tpu.memory_space<vmem>>, vector<4x8x8xf32>,
    } else {
    }
    %c0 = arith.constant 0 : index
    %c0_1 = arith.constant 0 : index
    %c0_2 = arith.constant 0 : index
    %3 = vector.load %arg4[%c0, %c0_1, %c0_2] : memref<1x8x32xf32, #tpu.memory_space<vmem>>, vector<1x8x32xf32>
    %4 = vector.shape_cast %3 : vector<1x8x32xf32> to vector<8x32xf32>
    %c0_3 = arith.constant 0 : index
    %c0_4 = arith.constant 0 : index
    %5 = vector.load %arg6[%c0_3, %c0_4] : memref<32x64xf32, #tpu.memory_space<vmem>>, vector<32x64xf32>
    %cst = arith.constant dense<0.000000e+00> : vector<8x64xf32>
    %6 = tpu.matmul %4, %5, %cst {dimension_numbers = #tpu.dot_dimension_numbers<[1], [0], [0], [1], [0, 0, 1, 1], [], []>} : vector<8x32xf32>, vector<32x64xf32>, vector<8x64xf32> -> vector<8x64xf32>
    %7 = vector.extract_strided_slice %6 {offsets = [0, 0], sizes = [8, 32], strides = [1, 1]} : vector<8x64xf32> to vector<8x32xf32>
    %8 = vector.extract_strided_slice %6 {offsets = [0, 32], sizes = [8, 32], strides = [1, 1]} : vector<8x64xf32> to vector<8x32xf32>
    %c0_5 = arith.constant 0 : index
    %c0_6 = arith.constant 0 : index
    %9 = vector.load %arg8[%c0_5, %c0_6] : memref<8x32xf32, #tpu.memory_space<vmem>>, vector<8x8xf32>
    %10 = vector.extract_strided_slice %7 {offsets = [0, 0], sizes = [8, 8], strides = [1, 1]} : vector<8x32xf32> to vector<8x8xf32>
    %11 = vector.extract_strided_slice %8 {offsets = [0, 0], sizes = [8, 8], strides = [1, 1]} : vector<8x32xf32> to vector<8x8xf32>
    %cst_7 = arith.constant dense<0.000000e+00> : vector<8x8xf32>
    %12 = tpu.matmul %9, %10, %cst_7 {dimension_numbers = #tpu.dot_dimension_numbers<[1], [1], [0], [0], [0, 0, 1, 0], [], []>} : vector<8x8xf32>, vector<8x8xf32>, vector<8x8xf32> -> vector<8x8xf32>
    %c0_8 = arith.constant 0 : index
    %c0_9 = arith.constant 0 : index
    %c0_10 = arith.constant 0 : index
    %13 = vector.load %arg9[%c0_8, %c0_9, %c0_10] : memref<4x8x1xf32, #tpu.memory_space<vmem>>, vector<1x8x1xf32>
    %14 = vector.shape_cast %13 : vector<1x8x1xf32> to vector<8x1xf32>
    %cst_11 = arith.constant dense<0xFF800000> : vector<8xf32>
    %15 = vector.multi_reduction <maximumf>, %12, %cst_11 [1] : vector<8x8xf32> to vector<8xf32>
    %16 = vector.shape_cast %15 : vector<8xf32> to vector<8x1xf32>
    %17 = arith.maximumf %14, %16 : vector<8x1xf32>
    %18 = arith.subf %14, %17 : vector<8x1xf32>
    %19 = math.exp %18 : vector<8x1xf32>
    %20 = vector.broadcast %17 : vector<8x1xf32> to vector<8x8xf32>
    %21 = arith.subf %12, %20 : vector<8x8xf32>
    %22 = math.exp %21 : vector<8x8xf32>
    %c0_12 = arith.constant 0 : index
    %c0_13 = arith.constant 0 : index
    %c0_14 = arith.constant 0 : index
    %23 = vector.load %arg10[%c0_12, %c0_13, %c0_14] : memref<4x8x1xf32, #tpu.memory_space<vmem>>, vector<1x8x1xf32>
    %24 = vector.shape_cast %23 : vector<1x8x1xf32> to vector<8x1xf32>
    %25 = arith.mulf %19, %24 : vector<8x1xf32>
    %cst_15 = arith.constant dense<0.000000e+00> : vector<8xf32>
    %26 = vector.multi_reduction <add>, %22, %cst_15 [1] : vector<8x8xf32> to vector<8xf32>
    %27 = vector.shape_cast %26 : vector<8xf32> to vector<8x1xf32>
    %28 = arith.addf %25, %27 : vector<8x1xf32>
    %c0_16 = arith.constant 0 : index
    %c0_17 = arith.constant 0 : index
    %c0_18 = arith.constant 0 : index
    %29 = vector.load %arg10[%c0_16, %c0_17, %c0_18] : memref<4x8x1xf32, #tpu.memory_space<vmem>>, vector<1x8x1xf32>
    %30 = vector.shape_cast %29 : vector<1x8x1xf32> to vector<8x1xf32>
    %31 = vector.shape_cast %28 : vector<8x1xf32> to vector<1x8x1xf32>
    tpu.vector_store %arg10[%c0_16, %c0_17, %c0_18], %31 {strides = array<i32>} : memref<4x8x1xf32, #tpu.memory_space<vmem>>, vector<1x8x1xf32>,
    %c0_19 = arith.constant 0 : index
    %c0_20 = arith.constant 0 : index
    %c0_21 = arith.constant 0 : index
    %32 = vector.load %arg11[%c0_19, %c0_20, %c0_21] : memref<4x8x8xf32, #tpu.memory_space<vmem>>, vector<1x8x8xf32>
    %33 = vector.shape_cast %32 : vector<1x8x8xf32> to vector<8x8xf32>
    %34 = vector.broadcast %19 : vector<8x1xf32> to vector<8x8xf32>
    %35 = arith.mulf %34, %33 : vector<8x8xf32>
    %cst_22 = arith.constant dense<0.000000e+00> : vector<8x8xf32>
    %36 = tpu.matmul %22, %11, %cst_22 {dimension_numbers = #tpu.dot_dimension_numbers<[1], [0], [0], [1], [0, 0, 1, 1], [], []>} : vector<8x8xf32>, vector<8x8xf32>, vector<8x8xf32> -> vector<8x8xf32>
    %37 = arith.addf %35, %36 : vector<8x8xf32>
    %c0_23 = arith.constant 0 : index
    %c0_24 = arith.constant 0 : index
    %c0_25 = arith.constant 0 : index
    %38 = vector.load %arg11[%c0_23, %c0_24, %c0_25] : memref<4x8x8xf32, #tpu.memory_space<vmem>>, vector<1x8x8xf32>
    %39 = vector.shape_cast %38 : vector<1x8x8xf32> to vector<8x8xf32>
    %40 = vector.shape_cast %37 : vector<8x8xf32> to vector<1x8x8xf32>
    tpu.vector_store %arg11[%c0_23, %c0_24, %c0_25], %40 {strides = array<i32>} : memref<4x8x8xf32, #tpu.memory_space<vmem>>, vector<1x8x8xf32>,
    %c0_26 = arith.constant 0 : index
    %c0_27 = arith.constant 0 : index
    %c0_28 = arith.constant 0 : index
    %41 = vector.load %arg9[%c0_26, %c0_27, %c0_28] : memref<4x8x1xf32, #tpu.memory_space<vmem>>, vector<1x8x1xf32>
    %42 = vector.shape_cast %41 : vector<1x8x1xf32> to vector<8x1xf32>
    %43 = vector.shape_cast %17 : vector<8x1xf32> to vector<1x8x1xf32>
    tpu.vector_store %arg9[%c0_26, %c0_27, %c0_28], %43 {strides = array<i32>} : memref<4x8x1xf32, #tpu.memory_space<vmem>>, vector<1x8x1xf32>,
    %c0_29 = arith.constant 0 : index
    %c8 = arith.constant 8 : index
    %44 = vector.load %arg8[%c0_29, %c8] : memref<8x32xf32, #tpu.memory_space<vmem>>, vector<8x8xf32>
    %45 = vector.extract_strided_slice %7 {offsets = [0, 8], sizes = [8, 8], strides = [1, 1]} : vector<8x32xf32> to vector<8x8xf32>
    %46 = vector.extract_strided_slice %8 {offsets = [0, 8], sizes = [8, 8], strides = [1, 1]} : vector<8x32xf32> to vector<8x8xf32>
    %cst_30 = arith.constant dense<0.000000e+00> : vector<8x8xf32>
    %47 = tpu.matmul %44, %45, %cst_30 {dimension_numbers = #tpu.dot_dimension_numbers<[1], [1], [0], [0], [0, 0, 1, 0], [], []>} : vector<8x8xf32>, vector<8x8xf32>, vector<8x8xf32> -> vector<8x8xf32>
    %c1 = arith.constant 1 : index
    %c0_31 = arith.constant 0 : index
    %c0_32 = arith.constant 0 : index
    %48 = vector.load %arg9[%c1, %c0_31, %c0_32] : memref<4x8x1xf32, #tpu.memory_space<vmem>>, vector<1x8x1xf32>
    %49 = vector.shape_cast %48 : vector<1x8x1xf32> to vector<8x1xf32>
    %cst_33 = arith.constant dense<0xFF800000> : vector<8xf32>
    %50 = vector.multi_reduction <maximumf>, %47, %cst_33 [1] : vector<8x8xf32> to vector<8xf32>
    %51 = vector.shape_cast %50 : vector<8xf32> to vector<8x1xf32>
    %52 = arith.maximumf %49, %51 : vector<8x1xf32>
    %53 = arith.subf %49, %52 : vector<8x1xf32>
    %54 = math.exp %53 : vector<8x1xf32>
    %55 = vector.broadcast %52 : vector<8x1xf32> to vector<8x8xf32>
    %56 = arith.subf %47, %55 : vector<8x8xf32>
    %57 = math.exp %56 : vector<8x8xf32>
    %c1_34 = arith.constant 1 : index
    %c0_35 = arith.constant 0 : index
    %c0_36 = arith.constant 0 : index
    %58 = vector.load %arg10[%c1_34, %c0_35, %c0_36] : memref<4x8x1xf32, #tpu.memory_space<vmem>>, vector<1x8x1xf32>
    %59 = vector.shape_cast %58 : vector<1x8x1xf32> to vector<8x1xf32>
    %60 = arith.mulf %54, %59 : vector<8x1xf32>
    %cst_37 = arith.constant dense<0.000000e+00> : vector<8xf32>
    %61 = vector.multi_reduction <add>, %57, %cst_37 [1] : vector<8x8xf32> to vector<8xf32>
    %62 = vector.shape_cast %61 : vector<8xf32> to vector<8x1xf32>
    %63 = arith.addf %60, %62 : vector<8x1xf32>
    %c1_38 = arith.constant 1 : index
    %c0_39 = arith.constant 0 : index
    %c0_40 = arith.constant 0 : index
    %64 = vector.load %arg10[%c1_38, %c0_39, %c0_40] : memref<4x8x1xf32, #tpu.memory_space<vmem>>, vector<1x8x1xf32>
    %65 = vector.shape_cast %64 : vector<1x8x1xf32> to vector<8x1xf32>
    %66 = vector.shape_cast %63 : vector<8x1xf32> to vector<1x8x1xf32>
    tpu.vector_store %arg10[%c1_38, %c0_39, %c0_40], %66 {strides = array<i32>} : memref<4x8x1xf32, #tpu.memory_space<vmem>>, vector<1x8x1xf32>,
    %c1_41 = arith.constant 1 : index
    %c0_42 = arith.constant 0 : index
    %c0_43 = arith.constant 0 : index
    %67 = vector.load %arg11[%c1_41, %c0_42, %c0_43] : memref<4x8x8xf32, #tpu.memory_space<vmem>>, vector<1x8x8xf32>
    %68 = vector.shape_cast %67 : vector<1x8x8xf32> to vector<8x8xf32>
    %69 = vector.broadcast %54 : vector<8x1xf32> to vector<8x8xf32>
    %70 = arith.mulf %69, %68 : vector<8x8xf32>
    %cst_44 = arith.constant dense<0.000000e+00> : vector<8x8xf32>
    %71 = tpu.matmul %57, %46, %cst_44 {dimension_numbers = #tpu.dot_dimension_numbers<[1], [0], [0], [1], [0, 0, 1, 1], [], []>} : vector<8x8xf32>, vector<8x8xf32>, vector<8x8xf32> -> vector<8x8xf32>
    %72 = arith.addf %70, %71 : vector<8x8xf32>
    %c1_45 = arith.constant 1 : index
    %c0_46 = arith.constant 0 : index
    %c0_47 = arith.constant 0 : index
    %73 = vector.load %arg11[%c1_45, %c0_46, %c0_47] : memref<4x8x8xf32, #tpu.memory_space<vmem>>, vector<1x8x8xf32>
    %74 = vector.shape_cast %73 : vector<1x8x8xf32> to vector<8x8xf32>
    %75 = vector.shape_cast %72 : vector<8x8xf32> to vector<1x8x8xf32>
    tpu.vector_store %arg11[%c1_45, %c0_46, %c0_47], %75 {strides = array<i32>} : memref<4x8x8xf32, #tpu.memory_space<vmem>>, vector<1x8x8xf32>,
    %c1_48 = arith.constant 1 : index
    %c0_49 = arith.constant 0 : index
    %c0_50 = arith.constant 0 : index
    %76 = vector.load %arg9[%c1_48, %c0_49, %c0_50] : memref<4x8x1xf32, #tpu.memory_space<vmem>>, vector<1x8x1xf32>
    %77 = vector.shape_cast %76 : vector<1x8x1xf32> to vector<8x1xf32>
    %78 = vector.shape_cast %52 : vector<8x1xf32> to vector<1x8x1xf32>
    tpu.vector_store %arg9[%c1_48, %c0_49, %c0_50], %78 {strides = array<i32>} : memref<4x8x1xf32, #tpu.memory_space<vmem>>, vector<1x8x1xf32>,
    %c0_51 = arith.constant 0 : index
    %c16 = arith.constant 16 : index
    %79 = vector.load %arg8[%c0_51, %c16] : memref<8x32xf32, #tpu.memory_space<vmem>>, vector<8x8xf32>
    %80 = vector.extract_strided_slice %7 {offsets = [0, 16], sizes = [8, 8], strides = [1, 1]} : vector<8x32xf32> to vector<8x8xf32>
    %81 = vector.extract_strided_slice %8 {offsets = [0, 16], sizes = [8, 8], strides = [1, 1]} : vector<8x32xf32> to vector<8x8xf32>
    %cst_52 = arith.constant dense<0.000000e+00> : vector<8x8xf32>
    %82 = tpu.matmul %79, %80, %cst_52 {dimension_numbers = #tpu.dot_dimension_numbers<[1], [1], [0], [0], [0, 0, 1, 0], [], []>} : vector<8x8xf32>, vector<8x8xf32>, vector<8x8xf32> -> vector<8x8xf32>
    %c2 = arith.constant 2 : index
    %c0_53 = arith.constant 0 : index
    %c0_54 = arith.constant 0 : index
    %83 = vector.load %arg9[%c2, %c0_53, %c0_54] : memref<4x8x1xf32, #tpu.memory_space<vmem>>, vector<1x8x1xf32>
    %84 = vector.shape_cast %83 : vector<1x8x1xf32> to vector<8x1xf32>
    %cst_55 = arith.constant dense<0xFF800000> : vector<8xf32>
    %85 = vector.multi_reduction <maximumf>, %82, %cst_55 [1] : vector<8x8xf32> to vector<8xf32>
    %86 = vector.shape_cast %85 : vector<8xf32> to vector<8x1xf32>
    %87 = arith.maximumf %84, %86 : vector<8x1xf32>
    %88 = arith.subf %84, %87 : vector<8x1xf32>
    %89 = math.exp %88 : vector<8x1xf32>
    %90 = vector.broadcast %87 : vector<8x1xf32> to vector<8x8xf32>
    %91 = arith.subf %82, %90 : vector<8x8xf32>
    %92 = math.exp %91 : vector<8x8xf32>
    %c2_56 = arith.constant 2 : index
    %c0_57 = arith.constant 0 : index
    %c0_58 = arith.constant 0 : index
    %93 = vector.load %arg10[%c2_56, %c0_57, %c0_58] : memref<4x8x1xf32, #tpu.memory_space<vmem>>, vector<1x8x1xf32>
    %94 = vector.shape_cast %93 : vector<1x8x1xf32> to vector<8x1xf32>
    %95 = arith.mulf %89, %94 : vector<8x1xf32>
    %cst_59 = arith.constant dense<0.000000e+00> : vector<8xf32>
    %96 = vector.multi_reduction <add>, %92, %cst_59 [1] : vector<8x8xf32> to vector<8xf32>
    %97 = vector.shape_cast %96 : vector<8xf32> to vector<8x1xf32>
    %98 = arith.addf %95, %97 : vector<8x1xf32>
    %c2_60 = arith.constant 2 : index
    %c0_61 = arith.constant 0 : index
    %c0_62 = arith.constant 0 : index
    %99 = vector.load %arg10[%c2_60, %c0_61, %c0_62] : memref<4x8x1xf32, #tpu.memory_space<vmem>>, vector<1x8x1xf32>
    %100 = vector.shape_cast %99 : vector<1x8x1xf32> to vector<8x1xf32>
    %101 = vector.shape_cast %98 : vector<8x1xf32> to vector<1x8x1xf32>
    tpu.vector_store %arg10[%c2_60, %c0_61, %c0_62], %101 {strides = array<i32>} : memref<4x8x1xf32, #tpu.memory_space<vmem>>, vector<1x8x1xf32>,
    %c2_63 = arith.constant 2 : index
    %c0_64 = arith.constant 0 : index
    %c0_65 = arith.constant 0 : index
    %102 = vector.load %arg11[%c2_63, %c0_64, %c0_65] : memref<4x8x8xf32, #tpu.memory_space<vmem>>, vector<1x8x8xf32>
    %103 = vector.shape_cast %102 : vector<1x8x8xf32> to vector<8x8xf32>
    %104 = vector.broadcast %89 : vector<8x1xf32> to vector<8x8xf32>
    %105 = arith.mulf %104, %103 : vector<8x8xf32>
    %cst_66 = arith.constant dense<0.000000e+00> : vector<8x8xf32>
    %106 = tpu.matmul %92, %81, %cst_66 {dimension_numbers = #tpu.dot_dimension_numbers<[1], [0], [0], [1], [0, 0, 1, 1], [], []>} : vector<8x8xf32>, vector<8x8xf32>, vector<8x8xf32> -> vector<8x8xf32>
    %107 = arith.addf %105, %106 : vector<8x8xf32>
    %c2_67 = arith.constant 2 : index
    %c0_68 = arith.constant 0 : index
    %c0_69 = arith.constant 0 : index
    %108 = vector.load %arg11[%c2_67, %c0_68, %c0_69] : memref<4x8x8xf32, #tpu.memory_space<vmem>>, vector<1x8x8xf32>
    %109 = vector.shape_cast %108 : vector<1x8x8xf32> to vector<8x8xf32>
    %110 = vector.shape_cast %107 : vector<8x8xf32> to vector<1x8x8xf32>
    tpu.vector_store %arg11[%c2_67, %c0_68, %c0_69], %110 {strides = array<i32>} : memref<4x8x8xf32, #tpu.memory_space<vmem>>, vector<1x8x8xf32>,
    %c2_70 = arith.constant 2 : index
    %c0_71 = arith.constant 0 : index
    %c0_72 = arith.constant 0 : index
    %111 = vector.load %arg9[%c2_70, %c0_71, %c0_72] : memref<4x8x1xf32, #tpu.memory_space<vmem>>, vector<1x8x1xf32>
    %112 = vector.shape_cast %111 : vector<1x8x1xf32> to vector<8x1xf32>
    %113 = vector.shape_cast %87 : vector<8x1xf32> to vector<1x8x1xf32>
    tpu.vector_store %arg9[%c2_70, %c0_71, %c0_72], %113 {strides = array<i32>} : memref<4x8x1xf32, #tpu.memory_space<vmem>>, vector<1x8x1xf32>,
    %c0_73 = arith.constant 0 : index
    %c24 = arith.constant 24 : index
    %114 = vector.load %arg8[%c0_73, %c24] : memref<8x32xf32, #tpu.memory_space<vmem>>, vector<8x8xf32>
    %115 = vector.extract_strided_slice %7 {offsets = [0, 24], sizes = [8, 8], strides = [1, 1]} : vector<8x32xf32> to vector<8x8xf32>
    %116 = vector.extract_strided_slice %8 {offsets = [0, 24], sizes = [8, 8], strides = [1, 1]} : vector<8x32xf32> to vector<8x8xf32>
    %cst_74 = arith.constant dense<0.000000e+00> : vector<8x8xf32>
    %117 = tpu.matmul %114, %115, %cst_74 {dimension_numbers = #tpu.dot_dimension_numbers<[1], [1], [0], [0], [0, 0, 1, 0], [], []>} : vector<8x8xf32>, vector<8x8xf32>, vector<8x8xf32> -> vector<8x8xf32>
    %c3 = arith.constant 3 : index
    %c0_75 = arith.constant 0 : index
    %c0_76 = arith.constant 0 : index
    %118 = vector.load %arg9[%c3, %c0_75, %c0_76] : memref<4x8x1xf32, #tpu.memory_space<vmem>>, vector<1x8x1xf32>
    %119 = vector.shape_cast %118 : vector<1x8x1xf32> to vector<8x1xf32>
    %cst_77 = arith.constant dense<0xFF800000> : vector<8xf32>
    %120 = vector.multi_reduction <maximumf>, %117, %cst_77 [1] : vector<8x8xf32> to vector<8xf32>
    %121 = vector.shape_cast %120 : vector<8xf32> to vector<8x1xf32>
    %122 = arith.maximumf %119, %121 : vector<8x1xf32>
    %123 = arith.subf %119, %122 : vector<8x1xf32>
    %124 = math.exp %123 : vector<8x1xf32>
    %125 = vector.broadcast %122 : vector<8x1xf32> to vector<8x8xf32>
    %126 = arith.subf %117, %125 : vector<8x8xf32>
    %127 = math.exp %126 : vector<8x8xf32>
    %c3_78 = arith.constant 3 : index
    %c0_79 = arith.constant 0 : index
    %c0_80 = arith.constant 0 : index
    %128 = vector.load %arg10[%c3_78, %c0_79, %c0_80] : memref<4x8x1xf32, #tpu.memory_space<vmem>>, vector<1x8x1xf32>
    %129 = vector.shape_cast %128 : vector<1x8x1xf32> to vector<8x1xf32>
    %130 = arith.mulf %124, %129 : vector<8x1xf32>
    %cst_81 = arith.constant dense<0.000000e+00> : vector<8xf32>
    %131 = vector.multi_reduction <add>, %127, %cst_81 [1] : vector<8x8xf32> to vector<8xf32>
    %132 = vector.shape_cast %131 : vector<8xf32> to vector<8x1xf32>
    %133 = arith.addf %130, %132 : vector<8x1xf32>
    %c3_82 = arith.constant 3 : index
    %c0_83 = arith.constant 0 : index
    %c0_84 = arith.constant 0 : index
    %134 = vector.load %arg10[%c3_82, %c0_83, %c0_84] : memref<4x8x1xf32, #tpu.memory_space<vmem>>, vector<1x8x1xf32>
    %135 = vector.shape_cast %134 : vector<1x8x1xf32> to vector<8x1xf32>
    %136 = vector.shape_cast %133 : vector<8x1xf32> to vector<1x8x1xf32>
    tpu.vector_store %arg10[%c3_82, %c0_83, %c0_84], %136 {strides = array<i32>} : memref<4x8x1xf32, #tpu.memory_space<vmem>>, vector<1x8x1xf32>,
    %c3_85 = arith.constant 3 : index
    %c0_86 = arith.constant 0 : index
    %c0_87 = arith.constant 0 : index
    %137 = vector.load %arg11[%c3_85, %c0_86, %c0_87] : memref<4x8x8xf32, #tpu.memory_space<vmem>>, vector<1x8x8xf32>
    %138 = vector.shape_cast %137 : vector<1x8x8xf32> to vector<8x8xf32>
    %139 = vector.broadcast %124 : vector<8x1xf32> to vector<8x8xf32>
    %140 = arith.mulf %139, %138 : vector<8x8xf32>
    %cst_88 = arith.constant dense<0.000000e+00> : vector<8x8xf32>
    %141 = tpu.matmul %127, %116, %cst_88 {dimension_numbers = #tpu.dot_dimension_numbers<[1], [0], [0], [1], [0, 0, 1, 1], [], []>} : vector<8x8xf32>, vector<8x8xf32>, vector<8x8xf32> -> vector<8x8xf32>
    %142 = arith.addf %140, %141 : vector<8x8xf32>
    %c3_89 = arith.constant 3 : index
    %c0_90 = arith.constant 0 : index
    %c0_91 = arith.constant 0 : index
    %143 = vector.load %arg11[%c3_89, %c0_90, %c0_91] : memref<4x8x8xf32, #tpu.memory_space<vmem>>, vector<1x8x8xf32>
    %144 = vector.shape_cast %143 : vector<1x8x8xf32> to vector<8x8xf32>
    %145 = vector.shape_cast %142 : vector<8x8xf32> to vector<1x8x8xf32>
    tpu.vector_store %arg11[%c3_89, %c0_90, %c0_91], %145 {strides = array<i32>} : memref<4x8x8xf32, #tpu.memory_space<vmem>>, vector<1x8x8xf32>,
    %c3_92 = arith.constant 3 : index
    %c0_93 = arith.constant 0 : index
    %c0_94 = arith.constant 0 : index
    %146 = vector.load %arg9[%c3_92, %c0_93, %c0_94] : memref<4x8x1xf32, #tpu.memory_space<vmem>>, vector<1x8x1xf32>
    %147 = vector.shape_cast %146 : vector<1x8x1xf32> to vector<8x1xf32>
    %148 = vector.shape_cast %122 : vector<8x1xf32> to vector<1x8x1xf32>
    tpu.vector_store %arg9[%c3_92, %c0_93, %c0_94], %148 {strides = array<i32>} : memref<4x8x1xf32, #tpu.memory_space<vmem>>, vector<1x8x1xf32>,
    %c0_i32_95 = arith.constant 0 : i32
    %149 = arith.cmpi eq, %arg2, %c0_i32_95 : i32
    %150 = arith.extui %149 : i1 to i32
    %c0_i32_96 = arith.constant 0 : i32
    %151 = arith.cmpi ne, %150, %c0_i32_96 : i32
    scf.if %151 {
      %c0_97 = arith.constant 0 : index
      %c0_98 = arith.constant 0 : index
      %c0_99 = arith.constant 0 : index
      %152 = vector.load %arg10[%c0_97, %c0_98, %c0_99] : memref<4x8x1xf32, #tpu.memory_space<vmem>>, vector<4x8x1xf32>
      %153 = tpu.reciprocal %152 {approx = true} : vector<4x8x1xf32> -> vector<4x8x1xf32>
      %c0_100 = arith.constant 0 : index
      %c0_101 = arith.constant 0 : index
      %c0_102 = arith.constant 0 : index
      %154 = vector.load %arg11[%c0_100, %c0_101, %c0_102] : memref<4x8x8xf32, #tpu.memory_space<vmem>>, vector<4x8x8xf32>
      %155 = vector.broadcast %153 : vector<4x8x1xf32> to vector<4x8x8xf32>
      %156 = arith.mulf %154, %155 : vector<4x8x8xf32>
      %157 = vector.extract_strided_slice %156 {offsets = [0, 0, 0], sizes = [1, 8, 8], strides = [1, 1, 1]} : vector<4x8x8xf32> to vector<1x8x8xf32>
      %158 = vector.shape_cast %157 : vector<1x8x8xf32> to vector<8x8xf32>
      %159 = vector.extract_strided_slice %156 {offsets = [1, 0, 0], sizes = [1, 8, 8], strides = [1, 1, 1]} : vector<4x8x8xf32> to vector<1x8x8xf32>
      %160 = vector.shape_cast %159 : vector<1x8x8xf32> to vector<8x8xf32>
      %161 = vector.extract_strided_slice %156 {offsets = [2, 0, 0], sizes = [1, 8, 8], strides = [1, 1, 1]} : vector<4x8x8xf32> to vector<1x8x8xf32>
      %162 = vector.shape_cast %161 : vector<1x8x8xf32> to vector<8x8xf32>
      %163 = vector.extract_strided_slice %156 {offsets = [3, 0, 0], sizes = [1, 8, 8], strides = [1, 1, 1]} : vector<4x8x8xf32> to vector<1x8x8xf32>
      %164 = vector.shape_cast %163 : vector<1x8x8xf32> to vector<8x8xf32>
      %165 = tpu.concatenate %158, %160, %162, %164 in 1 : vector<8x8xf32>, vector<8x8xf32>, vector<8x8xf32>, vector<8x8xf32> -> vector<8x32xf32>
      %c0_103 = arith.constant 0 : index
      %c0_104 = arith.constant 0 : index
      %c0_105 = arith.constant 0 : index
      %166 = vector.load %arg7[%c0_103, %c0_104, %c0_105] : memref<1x8x32xf32, #tpu.memory_space<vmem>>, vector<1x8x32xf32>
      %167 = vector.shape_cast %166 : vector<1x8x32xf32> to vector<8x32xf32>
      %168 = vector.shape_cast %165 : vector<8x32xf32> to vector<1x8x32xf32>
      tpu.vector_store %arg7[%c0_103, %c0_104, %c0_105], %168 {strides = array<i32>} : memref<1x8x32xf32, #tpu.memory_space<vmem>>, vector<1x8x32xf32>,
    } else {
    }
    return
  }
  func.func @transform_0(%arg0: i32, %arg1: i32, %arg2: i32) -> (i32, i32, i32) {
    %c0_i32 = arith.constant 0 : i32
    %c0_i32_0 = arith.constant 0 : i32
    return %arg0, %arg1, %c0_i32 : i32, i32, i32
  }
  func.func @transform_1(%arg0: i32, %arg1: i32, %arg2: i32) -> (i32, i32, i32) {
    %c0_i32 = arith.constant 0 : i32
    %c0_i32_0 = arith.constant 0 : i32
    return %arg0, %arg2, %c0_i32 : i32, i32, i32
  }
  func.func @transform_2(%arg0: i32, %arg1: i32, %arg2: i32) -> (i32, i32) {
    %c0_i32 = arith.constant 0 : i32
    %c0_i32_0 = arith.constant 0 : i32
    %c0_i32_1 = arith.constant 0 : i32
    return %c0_i32, %c0_i32_0 : i32, i32
  }
  func.func @transform_3(%arg0: i32, %arg1: i32, %arg2: i32) -> (i32, i32) {
    %c0_i32 = arith.constant 0 : i32
    %c0_i32_0 = arith.constant 0 : i32
    %c0_i32_1 = arith.constant 0 : i32
    return %c0_i32, %c0_i32_0 : i32, i32
  }
  func.func @transform_4(%arg0: i32, %arg1: i32, %arg2: i32) -> (i32, i32, i32) {
    %c0_i32 = arith.constant 0 : i32
    %c0_i32_0 = arith.constant 0 : i32
    return %arg0, %arg1, %c0_i32 : i32, i32, i32
  }
}

</mosaic_0001>

<llo_original>
// kernel: tpu_custom_call.1
$region0: #{tpu_custom_call.1}
  #allocation0 [shape = 'u32[]', space=smem, size = 0x4, offset = 0x4, fixed_abs, tag = 'smem constant byte address 0x4 - core index']
  #allocation1 [shape = 'u32[144,128]{1,0:T(1,128)}', space=vmem, size = 0x12000, scoped, tag = 'internal scratch']
  #allocation2 [shape = 'f32[8,32]{1,0:T(8,128)}', space=vmem, size = 0x1000, scoped, tag = 'scratch operand']
  #allocation3 [shape = 'f32[4,8,1]{2,1,0:T(8,128)}', space=vmem, size = 0x4000, scoped, tag = 'scratch operand']
  #allocation4 [shape = 'f32[4,8,1]{2,1,0:T(8,128)}', space=vmem, size = 0x4000, scoped, tag = 'scratch operand']
  #allocation5 [shape = 'f32[4,8,8]{2,1,0:T(8,128)}', space=vmem, size = 0x4000, scoped, tag = 'scratch operand']
  %s0 = inlined_call_operand.hbm [shape: f32[2,8,32], index: 0, kind: input, shape index: {}]
  %s1 = inlined_call_operand.hbm [shape: f32[2,8,32], index: 1, kind: input, shape index: {}]
  %s2 = inlined_call_operand.hbm [shape: f32[32,32], index: 2, kind: input, shape index: {}]
  %s3 = inlined_call_operand.hbm [shape: f32[32,64], index: 3, kind: input, shape index: {}]
  %s4 = inlined_call_operand.hbm [shape: f32[2,8,32], index: 4, kind: output, shape index: {}]
  %s5 = sld [smem:[#allocation0]]
  $region73: #{tpu_custom_call.1} parent=0
    _
  %s7 = ssub.s32 1, %s5
  %s8 = scalar_select 0, %s7, %s5
  $region1: #{tpu_custom_call.1} parent=0
    #allocation6 [shape = 'u8[8192]{0}', space=vmem, size = 0x2000, scoped, tag = 'input window, operand 0']
    #allocation7 [shape = 's32[2]{0}', space=sflag, size = 0x8, scoped, tag = 'scoped memory for tpu_custom_call.1']
    #allocation8 [shape = 's32[2]{0}', space=sflag, size = 0x8, scoped, tag = 'scoped memory for tpu_custom_call.1']
    #allocation9 [shape = 'u8[8192]{0}', space=vmem, size = 0x2000, scoped, tag = 'input window, operand 1']
    #allocation10 [shape = 's32[2]{0}', space=sflag, size = 0x8, scoped, tag = 'scoped memory for tpu_custom_call.1']
    #allocation11 [shape = 'u8[16384]{0}', space=vmem, size = 0x4000, scoped, tag = 'input window, operand 2, single buffered']
    #allocation12 [shape = 'u8[16384]{0}', space=vmem, size = 0x4000, scoped, tag = 'input window, operand 3, single buffered']
    #allocation13 [shape = 's32[1]{0}', space=sflag, size = 0x4, scoped, tag = 'scoped memory for tpu_custom_call.1']
    #allocation14 [shape = 'u8[8192]{0}', space=vmem, size = 0x2000, scoped, tag = 'output window, operand 0']
    %9 = vsyncpa [#allocation7], 0
    %s10 = scalar_lea.sflag [#allocation7], 1
    %11 = vsyncpa %s10, 0
    %12 = vsyncpa [#allocation10], 0
    %s13 = scalar_lea.sflag [#allocation10], 1
    %14 = vsyncpa %s13, 0
    %15 = vsyncpa [#allocation13], 0
    %16 = vsyncpa [#allocation8], 0
    %s17 = scalar_lea.sflag [#allocation8], 1
    %18 = vsyncpa %s17, 0
    loop: start=0, step=1, limit=4
    $region2: #{tpu_custom_call.1} parent=1 // loop_pre_header
      _
    $region3: #{tpu_custom_call.1} parent=1 // loop_header
      %s20 = sphi 0, %s24
      %p21 = scmp.ge.s32.totalorder %s20, 4
      %s27 = sphi 0, %s46
      %s28 = sphi 0, %s42
      %s29 = sphi 0, %s38
      %s30 = sphi 0, %s27
      %s31 = sphi 0, %s28
      %s32 = sphi 0, %s29
      %s33 = sphi 0, %s30
      %s34 = sphi 0, %s31
      %s35 = sphi 0, %s32
      %s51 = sphi 0, %s53
      %s54 = sphi 0, %s51
      %s55 = sphi 0, %s54
      %s71 = sphi 0, %s55
      %s79 = sphi 0, %s81
      %s82 = sphi 0, %s79
      %s83 = sphi 0, %s82
      %s99 = sphi 0, %s83
      %s103 = sphi 0, %s103
      %s105 = sphi 0, %s103
      %s106 = sphi 0, %s105
      %s120 = sphi 0, %s106
      %s124 = sphi 0, %s124
      %s126 = sphi 0, %s124
      %s127 = sphi 0, %s126
      %s141 = sphi 0, %s127
      %s149 = sphi 0, %s151
      %s152 = sphi 0, %s149
      %s153 = sphi 0, %s152
      %s169 = sphi 0, %s153
    $region4: #{tpu_custom_call.1} parent=1 // loop_header_branch
      %23 = sbr.rel (%p21) target = $region8
    $region5: #{tpu_custom_call.1} parent=1 // loop_body
      %s25 = ssub.s32 %s20, 1
      %s26 = ssub.s32 %s20, 2
      %s36 = sadd.s32 1, %s29
      %p37 = scmp.ge.s32.totalorder %s36, 1
      %s38 = scalar_select %p37, 0, %s36
      %s39 = sadd.s32 1, %s28
      %s40 = scalar_select %p37, %s39, %s28
      %p41 = scmp.ge.s32.totalorder %s40, 1
      %s42 = scalar_select %p41, 0, %s40
      %s43 = sadd.s32 1, %s27
      %s44 = scalar_select %p41, %s43, %s27
      %p45 = scmp.ge.s32.totalorder %s44, 2
      %s46 = scalar_select %p45, 0, %s44
      %s47 = ssub.s32 %s27, %s46
      %s48 = ssub.s32 %s28, %s42
      %s49 = sor.u32 %s47, %s48
      %p50 = scmp.eq.s32.totalorder %s49, 0
      %s52 = sadd.s32 %s51, 1
      %s53 = scalar_select %p50, %s51, %s52
      %p56 = pneg %p50
      %p57 = scmp.eq.s32.totalorder %s20, 1
      %p58 = por %p56, %p57
      %p59 = scmp.ne.s32.totalorder %s51, %s54
      %p60 = scmp.eq.s32.totalorder %s20, 0
      %p61 = por %p59, %p60
      %p62 = scmp.ne.s32.totalorder %s51, %s54
      %p63 = scmp.eq.s32.totalorder %s25, 1
      %p64 = por %p62, %p63
      %p65 = scmp.ne.s32.totalorder %s54, %s55
      %p66 = scmp.eq.s32.totalorder %s25, 0
      %p67 = por %p65, %p66
      %p68 = scmp.ne.s32.totalorder %s54, %s55
      %p69 = scmp.eq.s32.totalorder %s26, 1
      %p70 = por %p68, %p69
      %p72 = scmp.ne.s32.totalorder %s55, %s71
      %p73 = scmp.eq.s32.totalorder %s26, 0
      %p74 = por %p72, %p73
      %s75 = ssub.s32 %s27, %s46
      %s76 = ssub.s32 %s29, %s38
      %s77 = sor.u32 %s75, %s76
      %p78 = scmp.eq.s32.totalorder %s77, 0
      %s80 = sadd.s32 %s79, 1
      %s81 = scalar_select %p78, %s79, %s80
      %p84 = pneg %p78
      %p85 = scmp.eq.s32.totalorder %s20, 1
      %p86 = por %p84, %p85
      %p87 = scmp.ne.s32.totalorder %s79, %s82
      %p88 = scmp.eq.s32.totalorder %s20, 0
      %p89 = por %p87, %p88
      %p90 = scmp.ne.s32.totalorder %s79, %s82
      %p91 = scmp.eq.s32.totalorder %s25, 1
      %p92 = por %p90, %p91
      %p93 = scmp.ne.s32.totalorder %s82, %s83
      %p94 = scmp.eq.s32.totalorder %s25, 0
      %p95 = por %p93, %p94
      %p96 = scmp.ne.s32.totalorder %s82, %s83
      %p97 = scmp.eq.s32.totalorder %s26, 1
      %p98 = por %p96, %p97
      %p100 = scmp.ne.s32.totalorder %s83, %s99
      %p101 = scmp.eq.s32.totalorder %s26, 0
      %p102 = por %p100, %p101
      %s104 = sadd.s32 %s103, 1
      %p107 = scmp.eq.s32.totalorder %s20, 1
      %p108 = scmp.ne.s32.totalorder %s103, %s105
      %p109 = scmp.eq.s32.totalorder %s20, 0
      %p110 = por %p108, %p109
      %p111 = scmp.ne.s32.totalorder %s103, %s105
      %p112 = scmp.eq.s32.totalorder %s25, 1
      %p113 = por %p111, %p112
      %p114 = scmp.ne.s32.totalorder %s105, %s106
      %p115 = scmp.eq.s32.totalorder %s25, 0
      %p116 = por %p114, %p115
      %p117 = scmp.ne.s32.totalorder %s105, %s106
      %p118 = scmp.eq.s32.totalorder %s26, 1
      %p119 = por %p117, %p118
      %p121 = scmp.ne.s32.totalorder %s106, %s120
      %p122 = scmp.eq.s32.totalorder %s26, 0
      %p123 = por %p121, %p122
      %s125 = sadd.s32 %s124, 1
      %p128 = scmp.eq.s32.totalorder %s20, 1
      %p129 = scmp.ne.s32.totalorder %s124, %s126
      %p130 = scmp.eq.s32.totalorder %s20, 0
      %p131 = por %p129, %p130
      %p132 = scmp.ne.s32.totalorder %s124, %s126
      %p133 = scmp.eq.s32.totalorder %s25, 1
      %p134 = por %p132, %p133
      %p135 = scmp.ne.s32.totalorder %s126, %s127
      %p136 = scmp.eq.s32.totalorder %s25, 0
      %p137 = por %p135, %p136
      %p138 = scmp.ne.s32.totalorder %s126, %s127
      %p139 = scmp.eq.s32.totalorder %s26, 1
      %p140 = por %p138, %p139
      %p142 = scmp.ne.s32.totalorder %s127, %s141
      %p143 = scmp.eq.s32.totalorder %s26, 0
      %p144 = por %p142, %p143
      %s145 = ssub.s32 %s27, %s46
      %s146 = ssub.s32 %s28, %s42
      %s147 = sor.u32 %s145, %s146
      %p148 = scmp.eq.s32.totalorder %s147, 0
      %s150 = sadd.s32 %s149, 1
      %s151 = scalar_select %p148, %s149, %s150
      %p154 = pneg %p148
      %p155 = scmp.eq.s32.totalorder %s20, 1
      %p156 = por %p154, %p155
      %p157 = scmp.ne.s32.totalorder %s149, %s152
      %p158 = scmp.eq.s32.totalorder %s20, 0
      %p159 = por %p157, %p158
      %p160 = scmp.ne.s32.totalorder %s149, %s152
      %p161 = scmp.eq.s32.totalorder %s25, 1
      %p162 = por %p160, %p161
      %p163 = scmp.ne.s32.totalorder %s152, %s153
      %p164 = scmp.eq.s32.totalorder %s25, 0
      %p165 = por %p163, %p164
      %p166 = scmp.ne.s32.totalorder %s152, %s153
      %p167 = scmp.eq.s32.totalorder %s26, 1
      %p168 = por %p166, %p167
      %p170 = scmp.ne.s32.totalorder %s153, %s169
      %p171 = scmp.eq.s32.totalorder %s26, 0
      %p172 = por %p170, %p171
      %p173 = scmp.le.s32.totalorder 1, %s20
      %p174 = scmp.lt.s32.totalorder %s20, 3
      %p175 = pnand %p173, %p174
      %p176 = pneg %p175
      // Predicated region
      $region9: #{tpu_custom_call.1} parent=5 // pred_check
        _
      $region10: #{tpu_custom_call.1} parent=5 // pred_check_branch
        %178 = sbr.rel (%p175) target = $region12
      $region11: #{tpu_custom_call.1} parent=5 // pred_region
        %s179 = ssub.s32 %s20, 1
        // Predicated region
        $region13: #{tpu_custom_call.1} parent=11 // pred_check
          %p180 = pneg %p116
        $region14: #{tpu_custom_call.1} parent=11 // pred_check_branch
          %182 = sbr.rel (%p180) target = $region16
        $region15: #{tpu_custom_call.1} parent=11 // pred_region
          %s184 = ssub.s32 512, 512
          %185 = vsyncadd [#allocation10], %s184
          %s186 = sshll.u32 [#allocation11], 4
          %s187 = int_to_ptr.vmem [resolvable:$true] %s186
          %192 = dma.hbm_to_vmem [thread:$0]  %s2, 512, %s187, [#allocation10], 128, 128, 8
        $region16: #{tpu_custom_call.1} parent=11 // pred_fallthru
          _
        // Predicated region
        $region17: #{tpu_custom_call.1} parent=11 // pred_check
          %p193 = pneg %p137
        $region18: #{tpu_custom_call.1} parent=11 // pred_check_branch
          %195 = sbr.rel (%p193) target = $region20
        $region19: #{tpu_custom_call.1} parent=11 // pred_region
          %s197 = ssub.s32 512, 512
          %198 = vsyncadd [#allocation13], %s197
          %s199 = sshll.u32 [#allocation12], 4
          %s200 = int_to_ptr.vmem [resolvable:$true] %s199
          %205 = dma.hbm_to_vmem [thread:$0]  %s3, 512, %s200, [#allocation13], 128, 128, 8
        $region20: #{tpu_custom_call.1} parent=11 // pred_fallthru
          _
      $region12: #{tpu_custom_call.1} parent=5 // pred_fallthru
        _
      %p206 = scmp.lt.s32.totalorder %s20, 2
      // Predicated region
      $region21: #{tpu_custom_call.1} parent=5 // pred_check
        %p207 = pneg %p206
      $region22: #{tpu_custom_call.1} parent=5 // pred_check_branch
        %209 = sbr.rel (%p207) target = $region24
      $region23: #{tpu_custom_call.1} parent=5 // pred_region
        // Predicated region
        $region25: #{tpu_custom_call.1} parent=23 // pred_check
          %p210 = pneg %p61
        $region26: #{tpu_custom_call.1} parent=23 // pred_check_branch
          %212 = sbr.rel (%p210) target = $region28
        $region27: #{tpu_custom_call.1} parent=23 // pred_region
          %s213 = sand.u32 %s51, 1
          %s214 = scalar_lea.sflag [#allocation7], %s213
          %s215 = sand.u32 %s51, 1
          %s216 = smul.addr %s215, 8
          %s217 = scalar_lea.vmem [#allocation6], %s216
          %s219 = ssub.s32 128, 128
          %220 = vsyncadd %s214, %s219
          %s221 = sadd.s32 %s28, %s27
          %s222 = smul.addr %s221, 128
          %s223 = scalar_lea.hbm %s0, %s222
          %s225 = sshll.u32 %s217, 4
          %s226 = int_to_ptr.vmem [resolvable:$true] %s225
          %228 = dma.hbm_to_vmem [thread:$0]  %s223, 128, %s226, %s214
        $region28: #{tpu_custom_call.1} parent=23 // pred_fallthru
          _
        // Predicated region
        $region29: #{tpu_custom_call.1} parent=23 // pred_check
          %p229 = pneg %p89
        $region30: #{tpu_custom_call.1} parent=23 // pred_check_branch
          %231 = sbr.rel (%p229) target = $region32
        $region31: #{tpu_custom_call.1} parent=23 // pred_region
          %s232 = sand.u32 %s20, 1
          %s233 = scalar_lea.sflag [#allocation10], %s232
          %s234 = sand.u32 %s79, 1
          %s235 = smul.addr %s234, 8
          %s236 = scalar_lea.vmem [#allocation9], %s235
          %s238 = ssub.s32 128, 128
          %239 = vsyncadd %s233, %s238
          %s240 = sadd.s32 %s29, %s27
          %s241 = smul.addr %s240, 128
          %s242 = scalar_lea.hbm %s1, %s241
          %s244 = sshll.u32 %s236, 4
          %s245 = int_to_ptr.vmem [resolvable:$true] %s244
          %247 = dma.hbm_to_vmem [thread:$0]  %s242, 128, %s245, %s233
        $region32: #{tpu_custom_call.1} parent=23 // pred_fallthru
          _
      $region24: #{tpu_custom_call.1} parent=5 // pred_fallthru
        _
      %p248 = scmp.le.s32.totalorder 1, %s20
      %p249 = scmp.lt.s32.totalorder %s20, 3
      %p250 = pnand %p248, %p249
      %p251 = pneg %p250
      // Predicated region
      $region33: #{tpu_custom_call.1} parent=5 // pred_check
        _
      $region34: #{tpu_custom_call.1} parent=5 // pred_check_branch
        %253 = sbr.rel (%p250) target = $region36
      $region35: #{tpu_custom_call.1} parent=5 // pred_region
        %s254 = ssub.s32 %s20, 1
        %s255 = sand.u32 %s54, 1
        %s256 = scalar_lea.sflag [#allocation7], %s255
        %s257 = sand.u32 %s54, 1
        %s258 = smul.addr %s257, 8
        %s259 = scalar_lea.vmem [#allocation6], %s258
        // Predicated region
        $region37: #{tpu_custom_call.1} parent=35 // pred_check
          %p260 = pneg %p67
        $region38: #{tpu_custom_call.1} parent=35 // pred_check_branch
          %262 = sbr.rel (%p260) target = $region40
        $region39: #{tpu_custom_call.1} parent=35 // pred_region
          %263 = dma.done %s256, 128
        $region40: #{tpu_custom_call.1} parent=35 // pred_fallthru
          _
        %s264 = sand.u32 %s25, 1
        %s265 = scalar_lea.sflag [#allocation10], %s264
        %s266 = sand.u32 %s82, 1
        %s267 = smul.addr %s266, 8
        %s268 = scalar_lea.vmem [#allocation9], %s267
        // Predicated region
        $region41: #{tpu_custom_call.1} parent=35 // pred_check
          %p269 = pneg %p95
        $region42: #{tpu_custom_call.1} parent=35 // pred_check_branch
          %271 = sbr.rel (%p269) target = $region44
        $region43: #{tpu_custom_call.1} parent=35 // pred_region
          %272 = dma.done %s265, 128
        $region44: #{tpu_custom_call.1} parent=35 // pred_fallthru
          _
        // Predicated region
        $region45: #{tpu_custom_call.1} parent=35 // pred_check
          %p273 = pneg %p116
        $region46: #{tpu_custom_call.1} parent=35 // pred_check_branch
          %275 = sbr.rel (%p273) target = $region48
        $region47: #{tpu_custom_call.1} parent=35 // pred_region
          %276 = dma.done [#allocation10], 512
        $region48: #{tpu_custom_call.1} parent=35 // pred_fallthru
          _
        // Predicated region
        $region49: #{tpu_custom_call.1} parent=35 // pred_check
          %p277 = pneg %p137
        $region50: #{tpu_custom_call.1} parent=35 // pred_check_branch
          %279 = sbr.rel (%p277) target = $region52
        $region51: #{tpu_custom_call.1} parent=35 // pred_region
          %280 = dma.done [#allocation13], 512
        $region52: #{tpu_custom_call.1} parent=35 // pred_fallthru
          _
        %s281 = sand.u32 %s54, 1
        %s282 = scalar_lea.sflag [#allocation7], %s281
        %s283 = sand.u32 %s54, 1
        %s284 = smul.addr %s283, 8
        %s285 = scalar_lea.vmem [#allocation6], %s284
        %p286 = pneg %p67
        %p287 = pneg %p64
        %s288 = sand.u32 %s25, 1
        %s289 = scalar_lea.sflag [#allocation10], %s288
        %s290 = sand.u32 %s82, 1
        %s291 = smul.addr %s290, 8
        %s292 = scalar_lea.vmem [#allocation9], %s291
        %p293 = pneg %p95
        %p294 = pneg %p92
        %p295 = pneg %p116
        %p296 = pneg %p113
        %p297 = pneg %p137
        %p298 = pneg %p134
        %p299 = pneg %p165
        %p300 = pneg %p162
        %s301 = sand.u32 %s152, 1
        %s302 = scalar_lea.sflag [#allocation8], %s301
        %s303 = sand.u32 %s152, 1
        %s304 = smul.addr %s303, 8
        %s305 = scalar_lea.vmem [#allocation14], %s304
        %p306 = scmp.eq.s32.totalorder %s32, 0
        // Predicated region
        $region53: #{tpu_custom_call.1} parent=35 // pred_check
          %p307 = pneg %p306
        $region54: #{tpu_custom_call.1} parent=35 // pred_check_branch
          %309 = sbr.rel (%p307) target = $region56
        $region55: #{tpu_custom_call.1} parent=35 // pred_region
          %v310 = vld [vmem:[%s259] sm:$0xff]
          %v311 = vld [vmem:[#allocation11] sm:$0xff]
          %v312 = vld [vmem:[#allocation11 + $0x8] sm:$0xff]
          %v313 = vld [vmem:[#allocation11 + $0x10] sm:$0xff]
          %v314 = vld [vmem:[#allocation11 + $0x18] sm:$0xff]
          %vm315 = vcmask 261120
          %v317 = vsel %vm315, %v310, 0
          %319 = vmatprep.subr.mxu0 0.0
          %320 = vmatpush1.msra.mxu0 %v311
          %321 = vmatprep.subr.mxu0 0.0
          %322 = vmatpush1.msra.mxu0 %v312
          %323 = vmatprep.subr.mxu0 0.0
          %324 = vmatpush1.msra.mxu0 %v313
          %325 = vmatprep.subr.mxu0 0.0
          %326 = vmatpush1.msra.mxu0 %v314
          %327 = vmatprep.subr.mxu0 0.0
          %328 = vmatpush1.msra.mxu0 0.0
          %329 = vmatprep.subr.mxu0 0.0
          %330 = vmatpush1.msra.mxu0 0.0
          %331 = vmatprep.subr.mxu0 0.0
          %332 = vmatpush1.msra.mxu0 0.0
          %333 = vmatprep.subr.mxu0 0.0
          %334 = vmatpush1.msra.mxu0 0.0
          %335 = vmatprep.subr.mxu0 0.0
          %336 = vmatpush1.msra.mxu0 0.0
          %337 = vmatprep.subr.mxu0 0.0
          %338 = vmatpush1.msra.mxu0 0.0
          %339 = vmatprep.subr.mxu0 0.0
          %340 = vmatpush1.msra.mxu0 0.0
          %341 = vmatprep.subr.mxu0 0.0
          %342 = vmatpush1.msra.mxu0 0.0
          %343 = vmatprep.subr.mxu0 0.0
          %344 = vmatpush1.msra.mxu0 0.0
          %345 = vmatprep.subr.mxu0 0.0
          %346 = vmatpush1.msra.mxu0 0.0
          %347 = vmatprep.subr.mxu0 0.0
          %348 = vmatpush1.msra.mxu0 0.0
          %349 = vmatprep.subr.mxu0 0.0
          %350 = vmatpush1.msra.mxu0 0.0
          %351 = vmatprep.subr.mxu0 0.0
          %352 = vmatpush1.msra.mxu0 0.0
          %353 = vmatprep.subr.mxu0 0.0
          %354 = vmatpush1.msra.mxu0 0.0
          %355 = vmatprep.subr.mxu0 0.0
          %356 = vmatpush1.msra.mxu0 0.0
          %357 = vmatprep.subr.mxu0 0.0
          %358 = vmatpush1.msra.mxu0 0.0
          %359 = vmatprep.subr.mxu0 0.0
          %360 = vmatpush1.msra.mxu0 0.0
          %361 = vmatprep.subr.mxu0 0.0
          %362 = vmatpush1.msra.mxu0 0.0
          %363 = vmatprep.subr.mxu0 0.0
          %364 = vmatpush1.msra.mxu0 0.0
          %365 = vmatprep.subr.mxu0 0.0
          %366 = vmatpush1.msra.mxu0 0.0
          %367 = vmatprep.subr.mxu0 0.0
          %368 = vmatpush1.msra.mxu0 0.0
          %369 = vmatprep.subr.mxu0 0.0
          %370 = vmatpush1.msra.mxu0 0.0
          %371 = vmatprep.subr.mxu0 0.0
          %372 = vmatpush1.msra.mxu0 0.0
          %373 = vmatprep.subr.mxu0 0.0
          %374 = vmatpush1.msra.mxu0 0.0
          %375 = vmatprep.subr.mxu0 0.0
          %376 = vmatpush1.msra.mxu0 0.0
          %377 = vmatprep.subr.mxu0 0.0
          %378 = vmatpush1.msra.mxu0 0.0
          %379 = vmatprep.subr.mxu0 0.0
          %380 = vmatpush1.msra.mxu0 0.0
          %381 = vmatprep.subr.mxu0 0.0
          %382 = vmatpush1.msra.mxu0 0.0
          %383 = vmatprep.mubr.f32.mxu0 0.0
          %384 = vmatmul.mubr.f32.gmra.mrb[0].mxu0 %v317
          %v385 = vpop.f32.mrb[0].mxu0
          %v386 = vadd.f32 0.0, %v385
          %v387 = vpop.f32.mrb[0].mxu0
          %388 = vdwg.mxu0
          %389 = vst.msk [vmem:[#allocation2] sm:$0xff] %vm315, %v386
          %vm390 = vcmask 7168
          %391 = vst.msk [vmem:[#allocation3] sm:$0xff] %vm390, -inf
          %392 = vst.msk [vmem:[#allocation3 + $0x8] sm:$0xff] %vm390, -inf
          %393 = vst.msk [vmem:[#allocation3 + $0x10] sm:$0xff] %vm390, -inf
          %394 = vst.msk [vmem:[#allocation3 + $0x18] sm:$0xff] %vm390, -inf
          %395 = vst.msk [vmem:[#allocation4] sm:$0xff] %vm390, 0.0
          %396 = vst.msk [vmem:[#allocation4 + $0x8] sm:$0xff] %vm390, 0.0
          %397 = vst.msk [vmem:[#allocation4 + $0x10] sm:$0xff] %vm390, 0.0
          %398 = vst.msk [vmem:[#allocation4 + $0x18] sm:$0xff] %vm390, 0.0
          %vm399 = vcmask 64512
          %400 = vst.msk [vmem:[#allocation5] sm:$0xff] %vm399, 0.0
          %401 = vst.msk [vmem:[#allocation5 + $0x8] sm:$0xff] %vm399, 0.0
          %402 = vst.msk [vmem:[#allocation5 + $0x10] sm:$0xff] %vm399, 0.0
          %403 = vst.msk [vmem:[#allocation5 + $0x18] sm:$0xff] %vm399, 0.0
        $region56: #{tpu_custom_call.1} parent=35 // pred_fallthru
          _
        %v404 = vld [vmem:[%s268] sm:$0xff]
        %v405 = vld [vmem:[#allocation12] sm:$0xff]
        %v406 = vld [vmem:[#allocation12 + $0x8] sm:$0xff]
        %v407 = vld [vmem:[#allocation12 + $0x10] sm:$0xff]
        %v408 = vld [vmem:[#allocation12 + $0x18] sm:$0xff]
        %vm409 = vcmask 261120
        %v411 = vsel %vm409, %v404, 0
        %413 = vmatprep.subr.mxu0 0.0
        %414 = vmatpush1.msra.mxu0 %v405
        %415 = vmatprep.subr.mxu0 0.0
        %416 = vmatpush1.msra.mxu0 %v406
        %417 = vmatprep.subr.mxu0 0.0
        %418 = vmatpush1.msra.mxu0 %v407
        %419 = vmatprep.subr.mxu0 0.0
        %420 = vmatpush1.msra.mxu0 %v408
        %421 = vmatprep.subr.mxu0 0.0
        %422 = vmatpush1.msra.mxu0 0.0
        %423 = vmatprep.subr.mxu0 0.0
        %424 = vmatpush1.msra.mxu0 0.0
        %425 = vmatprep.subr.mxu0 0.0
        %426 = vmatpush1.msra.mxu0 0.0
        %427 = vmatprep.subr.mxu0 0.0
        %428 = vmatpush1.msra.mxu0 0.0
        %429 = vmatprep.subr.mxu0 0.0
        %430 = vmatpush1.msra.mxu0 0.0
        %431 = vmatprep.subr.mxu0 0.0
        %432 = vmatpush1.msra.mxu0 0.0
        %433 = vmatprep.subr.mxu0 0.0
        %434 = vmatpush1.msra.mxu0 0.0
        %435 = vmatprep.subr.mxu0 0.0
        %436 = vmatpush1.msra.mxu0 0.0
        %437 = vmatprep.subr.mxu0 0.0
        %438 = vmatpush1.msra.mxu0 0.0
        %439 = vmatprep.subr.mxu0 0.0
        %440 = vmatpush1.msra.mxu0 0.0
        %441 = vmatprep.subr.mxu0 0.0
        %442 = vmatpush1.msra.mxu0 0.0
        %443 = vmatprep.subr.mxu0 0.0
        %444 = vmatpush1.msra.mxu0 0.0
        %445 = vmatprep.subr.mxu0 0.0
        %446 = vmatpush1.msra.mxu0 0.0
        %447 = vmatprep.subr.mxu0 0.0
        %448 = vmatpush1.msra.mxu0 0.0
        %449 = vmatprep.subr.mxu0 0.0
        %450 = vmatpush1.msra.mxu0 0.0
        %451 = vmatprep.subr.mxu0 0.0
        %452 = vmatpush1.msra.mxu0 0.0
        %453 = vmatprep.subr.mxu0 0.0
        %454 = vmatpush1.msra.mxu0 0.0
        %455 = vmatprep.subr.mxu0 0.0
        %456 = vmatpush1.msra.mxu0 0.0
        %457 = vmatprep.subr.mxu0 0.0
        %458 = vmatpush1.msra.mxu0 0.0
        %459 = vmatprep.subr.mxu0 0.0
        %460 = vmatpush1.msra.mxu0 0.0
        %461 = vmatprep.subr.mxu0 0.0
        %462 = vmatpush1.msra.mxu0 0.0
        %463 = vmatprep.subr.mxu0 0.0
        %464 = vmatpush1.msra.mxu0 0.0
        %465 = vmatprep.subr.mxu0 0.0
        %466 = vmatpush1.msra.mxu0 0.0
        %467 = vmatprep.subr.mxu0 0.0
        %468 = vmatpush1.msra.mxu0 0.0
        %469 = vmatprep.subr.mxu0 0.0
        %470 = vmatpush1.msra.mxu0 0.0
        %471 = vmatprep.subr.mxu0 0.0
        %472 = vmatpush1.msra.mxu0 0.0
        %473 = vmatprep.subr.mxu0 0.0
        %474 = vmatpush1.msra.mxu0 0.0
        %475 = vmatprep.subr.mxu0 0.0
        %476 = vmatpush1.msra.mxu0 0.0
        %477 = vmatprep.mubr.f32.mxu0 0.0
        %478 = vmatmul.mubr.f32.gmra.mrb[0].mxu0 %v411
        %v479 = vpop.f32.mrb[0].mxu0
        %v480 = vadd.f32 0.0, %v479
        %v481 = vpop.f32.mrb[0].mxu0
        %482 = vdwg.mxu0
        %v483 = vld [vmem:[#allocation2] sm:$0xff]
        %vm484 = vcmask 64512
        %v486 = vsel %vm484, %v483, 0
        %v489 = vsel %vm484, %v480, 0
        %491 = vmatprep.subr.mxu0 0.0
        %492 = vmatpush1.xpose.msra.mxu0 %v489
        %493 = vmatprep.subr.mxu0 0.0
        %494 = vmatpush1.xpose.msra.mxu0 0.0
        %495 = vmatprep.subr.mxu0 0.0
        %496 = vmatpush1.xpose.msra.mxu0 0.0
        %497 = vmatprep.subr.mxu0 0.0
        %498 = vmatpush1.xpose.msra.mxu0 0.0
        %499 = vmatprep.subr.mxu0 0.0
        %500 = vmatpush1.xpose.msra.mxu0 0.0
        %501 = vmatprep.subr.mxu0 0.0
        %502 = vmatpush1.xpose.msra.mxu0 0.0
        %503 = vmatprep.subr.mxu0 0.0
        %504 = vmatpush1.xpose.msra.mxu0 0.0
        %505 = vmatprep.subr.mxu0 0.0
        %506 = vmatpush1.xpose.msra.mxu0 0.0
        %507 = vmatprep.subr.mxu0 0.0
        %508 = vmatpush1.xpose.msra.mxu0 0.0
        %509 = vmatprep.subr.mxu0 0.0
        %510 = vmatpush1.xpose.msra.mxu0 0.0
        %511 = vmatprep.subr.mxu0 0.0
        %512 = vmatpush1.xpose.msra.mxu0 0.0
        %513 = vmatprep.subr.mxu0 0.0
        %514 = vmatpush1.xpose.msra.mxu0 0.0
        %515 = vmatprep.subr.mxu0 0.0
        %516 = vmatpush1.xpose.msra.mxu0 0.0
        %517 = vmatprep.subr.mxu0 0.0
        %518 = vmatpush1.xpose.msra.mxu0 0.0
        %519 = vmatprep.subr.mxu0 0.0
        %520 = vmatpush1.xpose.msra.mxu0 0.0
        %521 = vmatprep.subr.mxu0 0.0
        %522 = vmatpush1.xpose.msra.mxu0 0.0
        %523 = vmatprep.subr.mxu0 0.0
        %524 = vmatpush1.xpose.msra.mxu0 0.0
        %525 = vmatprep.subr.mxu0 0.0
        %526 = vmatpush1.xpose.msra.mxu0 0.0
        %527 = vmatprep.subr.mxu0 0.0
        %528 = vmatpush1.xpose.msra.mxu0 0.0
        %529 = vmatprep.subr.mxu0 0.0
        %530 = vmatpush1.xpose.msra.mxu0 0.0
        %531 = vmatprep.subr.mxu0 0.0
        %532 = vmatpush1.xpose.msra.mxu0 0.0
        %533 = vmatprep.subr.mxu0 0.0
        %534 = vmatpush1.xpose.msra.mxu0 0.0
        %535 = vmatprep.subr.mxu0 0.0
        %536 = vmatpush1.xpose.msra.mxu0 0.0
        %537 = vmatprep.subr.mxu0 0.0
        %538 = vmatpush1.xpose.msra.mxu0 0.0
        %539 = vmatprep.subr.mxu0 0.0
        %540 = vmatpush1.xpose.msra.mxu0 0.0
        %541 = vmatprep.subr.mxu0 0.0
        %542 = vmatpush1.xpose.msra.mxu0 0.0
        %543 = vmatprep.subr.mxu0 0.0
        %544 = vmatpush1.xpose.msra.mxu0 0.0
        %545 = vmatprep.subr.mxu0 0.0
        %546 = vmatpush1.xpose.msra.mxu0 0.0
        %547 = vmatprep.subr.mxu0 0.0
        %548 = vmatpush1.xpose.msra.mxu0 0.0
        %549 = vmatprep.subr.mxu0 0.0
        %550 = vmatpush1.xpose.msra.mxu0 0.0
        %551 = vmatprep.subr.mxu0 0.0
        %552 = vmatpush1.xpose.msra.mxu0 0.0
        %553 = vmatprep.subr.mxu0 0.0
        %554 = vmatpush1.xpose.msra.mxu0 0.0
        %555 = vmatprep.mubr.f32.mxu0 0.0
        %556 = vmatmul.mubr.f32.gmra.mrb[0].mxu0 %v486
        %v557 = vpop.f32.mrb[0].mxu0
        %v558 = vadd.f32 0.0, %v557
        %v559 = vpop.f32.mrb[0].mxu0
        %560 = vdwg.mxu0
        %v561 = vld [vmem:[#allocation3] sm:$0xff]
        %v562 = vsel %vm484, %v558, -inf
        %563 = vmax.xlane.f32.xlu0 %v562
        %v564 = vpop.xlane.xlu0 %563
        %v565 = vmax.f32 %v561, %v564
        %v566 = vsub.f32 %v561, %v565
        %v567 = vmul.f32 %v566, 1.442695
        %v568 = vpow.pop %v567
        %570 = vset.pattern.permute.xlu0 0
        %571 = vperm.xlu0 %570, %v565
        %v572 = vpop.permute.xlu0 %571
        %v574 = vsub.f32 %v558, %v572
        %v575 = vmul.f32 %v574, 1.442695
        %v576 = vpow.pop %v575
        %v577 = vld [vmem:[#allocation4] sm:$0xff]
        %v578 = vmul.f32 %v568, %v577
        %v579 = vsel %vm484, %v576, 0.0
        %580 = vadd.xlane.f32.xlu0 %v579
        %v581 = vpop.xlane.xlu0 %580
        %v582 = vadd.f32 %v578, %v581
        %vm583 = vcmask 7168
        %584 = vst.msk [vmem:[#allocation4] sm:$0xff] %vm583, %v582
        %v585 = vld [vmem:[#allocation5] sm:$0xff]
        %587 = vset.pattern.permute.xlu0 0
        %588 = vperm.xlu0 %587, %v568
        %v589 = vpop.permute.xlu0 %588
        %v591 = vmul.f32 %v589, %v585
        %592 = vrot.lane.b32.xlu0 %v480, 96
        %v593 = vpop.permute.xlu0 %592
        %v596 = vsel %vm484, %v576, 0
        %598 = vmatprep.subr.mxu0 0.0
        %599 = vmatpush1.msra.mxu0 %v593
        %600 = vmatprep.subr.mxu0 0.0
        %601 = vmatpush1.msra.mxu0 0.0
        %602 = vmatprep.subr.mxu0 0.0
        %603 = vmatpush1.msra.mxu0 0.0
        %604 = vmatprep.subr.mxu0 0.0
        %605 = vmatpush1.msra.mxu0 0.0
        %606 = vmatprep.subr.mxu0 0.0
        %607 = vmatpush1.msra.mxu0 0.0
        %608 = vmatprep.subr.mxu0 0.0
        %609 = vmatpush1.msra.mxu0 0.0
        %610 = vmatprep.subr.mxu0 0.0
        %611 = vmatpush1.msra.mxu0 0.0
        %612 = vmatprep.subr.mxu0 0.0
        %613 = vmatpush1.msra.mxu0 0.0
        %614 = vmatprep.subr.mxu0 0.0
        %615 = vmatpush1.msra.mxu0 0.0
        %616 = vmatprep.subr.mxu0 0.0
        %617 = vmatpush1.msra.mxu0 0.0
        %618 = vmatprep.subr.mxu0 0.0
        %619 = vmatpush1.msra.mxu0 0.0
        %620 = vmatprep.subr.mxu0 0.0
        %621 = vmatpush1.msra.mxu0 0.0
        %622 = vmatprep.subr.mxu0 0.0
        %623 = vmatpush1.msra.mxu0 0.0
        %624 = vmatprep.subr.mxu0 0.0
        %625 = vmatpush1.msra.mxu0 0.0
        %626 = vmatprep.subr.mxu0 0.0
        %627 = vmatpush1.msra.mxu0 0.0
        %628 = vmatprep.subr.mxu0 0.0
        %629 = vmatpush1.msra.mxu0 0.0
        %630 = vmatprep.subr.mxu0 0.0
        %631 = vmatpush1.msra.mxu0 0.0
        %632 = vmatprep.subr.mxu0 0.0
        %633 = vmatpush1.msra.mxu0 0.0
        %634 = vmatprep.subr.mxu0 0.0
        %635 = vmatpush1.msra.mxu0 0.0
        %636 = vmatprep.subr.mxu0 0.0
        %637 = vmatpush1.msra.mxu0 0.0
        %638 = vmatprep.subr.mxu0 0.0
        %639 = vmatpush1.msra.mxu0 0.0
        %640 = vmatprep.subr.mxu0 0.0
        %641 = vmatpush1.msra.mxu0 0.0
        %642 = vmatprep.subr.mxu0 0.0
        %643 = vmatpush1.msra.mxu0 0.0
        %644 = vmatprep.subr.mxu0 0.0
        %645 = vmatpush1.msra.mxu0 0.0
        %646 = vmatprep.subr.mxu0 0.0
        %647 = vmatpush1.msra.mxu0 0.0
        %648 = vmatprep.subr.mxu0 0.0
        %649 = vmatpush1.msra.mxu0 0.0
        %650 = vmatprep.subr.mxu0 0.0
        %651 = vmatpush1.msra.mxu0 0.0
        %652 = vmatprep.subr.mxu0 0.0
        %653 = vmatpush1.msra.mxu0 0.0
        %654 = vmatprep.subr.mxu0 0.0
        %655 = vmatpush1.msra.mxu0 0.0
        %656 = vmatprep.subr.mxu0 0.0
        %657 = vmatpush1.msra.mxu0 0.0
        %658 = vmatprep.subr.mxu0 0.0
        %659 = vmatpush1.msra.mxu0 0.0
        %660 = vmatprep.subr.mxu0 0.0
        %661 = vmatpush1.msra.mxu0 0.0
        %662 = vmatprep.mubr.f32.mxu0 0.0
        %663 = vmatmul.mubr.f32.gmra.mrb[0].mxu0 %v596
        %v664 = vpop.f32.mrb[0].mxu0
        %v665 = vadd.f32 0.0, %v664
        %v666 = vpop.f32.mrb[0].mxu0
        %667 = vdwg.mxu0
        %v668 = vadd.f32 %v591, %v665
        %669 = vst.msk [vmem:[#allocation5] sm:$0xff] %vm484, %v668
        %670 = vst.msk [vmem:[#allocation3] sm:$0xff] %vm583, %v565
        %v671 = vld [vmem:[#allocation2] sm:$0xff]
        %673 = vrot.lane.b32.xlu0 %v671, 120
        %v674 = vpop.permute.xlu0 %673
        %675 = vrot.lane.b32.xlu0 %v480, 120
        %v676 = vpop.permute.xlu0 %675
        %v677 = vsel %vm484, %v674, 0
        %v679 = vsel %vm484, %v676, 0
        %681 = vmatprep.subr.mxu0 0.0
        %682 = vmatpush1.xpose.msra.mxu0 %v679
        %683 = vmatprep.subr.mxu0 0.0
        %684 = vmatpush1.xpose.msra.mxu0 0.0
        %685 = vmatprep.subr.mxu0 0.0
        %686 = vmatpush1.xpose.msra.mxu0 0.0
        %687 = vmatprep.subr.mxu0 0.0
        %688 = vmatpush1.xpose.msra.mxu0 0.0
        %689 = vmatprep.subr.mxu0 0.0
        %690 = vmatpush1.xpose.msra.mxu0 0.0
        %691 = vmatprep.subr.mxu0 0.0
        %692 = vmatpush1.xpose.msra.mxu0 0.0
        %693 = vmatprep.subr.mxu0 0.0
        %694 = vmatpush1.xpose.msra.mxu0 0.0
        %695 = vmatprep.subr.mxu0 0.0
        %696 = vmatpush1.xpose.msra.mxu0 0.0
        %697 = vmatprep.subr.mxu0 0.0
        %698 = vmatpush1.xpose.msra.mxu0 0.0
        %699 = vmatprep.subr.mxu0 0.0
        %700 = vmatpush1.xpose.msra.mxu0 0.0
        %701 = vmatprep.subr.mxu0 0.0
        %702 = vmatpush1.xpose.msra.mxu0 0.0
        %703 = vmatprep.subr.mxu0 0.0
        %704 = vmatpush1.xpose.msra.mxu0 0.0
        %705 = vmatprep.subr.mxu0 0.0
        %706 = vmatpush1.xpose.msra.mxu0 0.0
        %707 = vmatprep.subr.mxu0 0.0
        %708 = vmatpush1.xpose.msra.mxu0 0.0
        %709 = vmatprep.subr.mxu0 0.0
        %710 = vmatpush1.xpose.msra.mxu0 0.0
        %711 = vmatprep.subr.mxu0 0.0
        %712 = vmatpush1.xpose.msra.mxu0 0.0
        %713 = vmatprep.subr.mxu0 0.0
        %714 = vmatpush1.xpose.msra.mxu0 0.0
        %715 = vmatprep.subr.mxu0 0.0
        %716 = vmatpush1.xpose.msra.mxu0 0.0
        %717 = vmatprep.subr.mxu0 0.0
        %718 = vmatpush1.xpose.msra.mxu0 0.0
        %719 = vmatprep.subr.mxu0 0.0
        %720 = vmatpush1.xpose.msra.mxu0 0.0
        %721 = vmatprep.subr.mxu0 0.0
        %722 = vmatpush1.xpose.msra.mxu0 0.0
        %723 = vmatprep.subr.mxu0 0.0
        %724 = vmatpush1.xpose.msra.mxu0 0.0
        %725 = vmatprep.subr.mxu0 0.0
        %726 = vmatpush1.xpose.msra.mxu0 0.0
        %727 = vmatprep.subr.mxu0 0.0
        %728 = vmatpush1.xpose.msra.mxu0 0.0
        %729 = vmatprep.subr.mxu0 0.0
        %730 = vmatpush1.xpose.msra.mxu0 0.0
        %731 = vmatprep.subr.mxu0 0.0
        %732 = vmatpush1.xpose.msra.mxu0 0.0
        %733 = vmatprep.subr.mxu0 0.0
        %734 = vmatpush1.xpose.msra.mxu0 0.0
        %735 = vmatprep.subr.mxu0 0.0
        %736 = vmatpush1.xpose.msra.mxu0 0.0
        %737 = vmatprep.subr.mxu0 0.0
        %738 = vmatpush1.xpose.msra.mxu0 0.0
        %739 = vmatprep.subr.mxu0 0.0
        %740 = vmatpush1.xpose.msra.mxu0 0.0
        %741 = vmatprep.subr.mxu0 0.0
        %742 = vmatpush1.xpose.msra.mxu0 0.0
        %743 = vmatprep.subr.mxu0 0.0
        %744 = vmatpush1.xpose.msra.mxu0 0.0
        %745 = vmatprep.mubr.f32.mxu0 0.0
        %746 = vmatmul.mubr.f32.gmra.mrb[0].mxu0 %v677
        %v747 = vpop.f32.mrb[0].mxu0
        %v748 = vadd.f32 0.0, %v747
        %v749 = vpop.f32.mrb[0].mxu0
        %750 = vdwg.mxu0
        %s751 = scalar_lea.vmem [#allocation3], 8
        %v752 = vld [vmem:[%s751] sm:$0xff]
        %v753 = vsel %vm484, %v748, -inf
        %754 = vmax.xlane.f32.xlu0 %v753
        %v755 = vpop.xlane.xlu0 %754
        %v756 = vmax.f32 %v752, %v755
        %v757 = vsub.f32 %v752, %v756
        %v758 = vmul.f32 %v757, 1.442695
        %v759 = vpow.pop %v758
        %761 = vset.pattern.permute.xlu0 0
        %762 = vperm.xlu0 %761, %v756
        %v763 = vpop.permute.xlu0 %762
        %v765 = vsub.f32 %v748, %v763
        %v766 = vmul.f32 %v765, 1.442695
        %v767 = vpow.pop %v766
        %s768 = scalar_lea.vmem [#allocation4], 8
        %v769 = vld [vmem:[%s768] sm:$0xff]
        %v770 = vmul.f32 %v759, %v769
        %v771 = vsel %vm484, %v767, 0.0
        %772 = vadd.xlane.f32.xlu0 %v771
        %v773 = vpop.xlane.xlu0 %772
        %v774 = vadd.f32 %v770, %v773
        %775 = vst.msk [vmem:[%s768] sm:$0xff] %vm583, %v774
        %s776 = scalar_lea.vmem [#allocation5], 8
        %v777 = vld [vmem:[%s776] sm:$0xff]
        %779 = vset.pattern.permute.xlu0 0
        %780 = vperm.xlu0 %779, %v759
        %v781 = vpop.permute.xlu0 %780
        %v783 = vmul.f32 %v781, %v777
        %784 = vrot.lane.b32.xlu0 %v480, 88
        %v785 = vpop.permute.xlu0 %784
        %v788 = vsel %vm484, %v767, 0
        %790 = vmatprep.subr.mxu0 0.0
        %791 = vmatpush1.msra.mxu0 %v785
        %792 = vmatprep.subr.mxu0 0.0
        %793 = vmatpush1.msra.mxu0 0.0
        %794 = vmatprep.subr.mxu0 0.0
        %795 = vmatpush1.msra.mxu0 0.0
        %796 = vmatprep.subr.mxu0 0.0
        %797 = vmatpush1.msra.mxu0 0.0
        %798 = vmatprep.subr.mxu0 0.0
        %799 = vmatpush1.msra.mxu0 0.0
        %800 = vmatprep.subr.mxu0 0.0
        %801 = vmatpush1.msra.mxu0 0.0
        %802 = vmatprep.subr.mxu0 0.0
        %803 = vmatpush1.msra.mxu0 0.0
        %804 = vmatprep.subr.mxu0 0.0
        %805 = vmatpush1.msra.mxu0 0.0
        %806 = vmatprep.subr.mxu0 0.0
        %807 = vmatpush1.msra.mxu0 0.0
        %808 = vmatprep.subr.mxu0 0.0
        %809 = vmatpush1.msra.mxu0 0.0
        %810 = vmatprep.subr.mxu0 0.0
        %811 = vmatpush1.msra.mxu0 0.0
        %812 = vmatprep.subr.mxu0 0.0
        %813 = vmatpush1.msra.mxu0 0.0
        %814 = vmatprep.subr.mxu0 0.0
        %815 = vmatpush1.msra.mxu0 0.0
        %816 = vmatprep.subr.mxu0 0.0
        %817 = vmatpush1.msra.mxu0 0.0
        %818 = vmatprep.subr.mxu0 0.0
        %819 = vmatpush1.msra.mxu0 0.0
        %820 = vmatprep.subr.mxu0 0.0
        %821 = vmatpush1.msra.mxu0 0.0
        %822 = vmatprep.subr.mxu0 0.0
        %823 = vmatpush1.msra.mxu0 0.0
        %824 = vmatprep.subr.mxu0 0.0
        %825 = vmatpush1.msra.mxu0 0.0
        %826 = vmatprep.subr.mxu0 0.0
        %827 = vmatpush1.msra.mxu0 0.0
        %828 = vmatprep.subr.mxu0 0.0
        %829 = vmatpush1.msra.mxu0 0.0
        %830 = vmatprep.subr.mxu0 0.0
        %831 = vmatpush1.msra.mxu0 0.0
        %832 = vmatprep.subr.mxu0 0.0
        %833 = vmatpush1.msra.mxu0 0.0
        %834 = vmatprep.subr.mxu0 0.0
        %835 = vmatpush1.msra.mxu0 0.0
        %836 = vmatprep.subr.mxu0 0.0
        %837 = vmatpush1.msra.mxu0 0.0
        %838 = vmatprep.subr.mxu0 0.0
        %839 = vmatpush1.msra.mxu0 0.0
        %840 = vmatprep.subr.mxu0 0.0
        %841 = vmatpush1.msra.mxu0 0.0
        %842 = vmatprep.subr.mxu0 0.0
        %843 = vmatpush1.msra.mxu0 0.0
        %844 = vmatprep.subr.mxu0 0.0
        %845 = vmatpush1.msra.mxu0 0.0
        %846 = vmatprep.subr.mxu0 0.0
        %847 = vmatpush1.msra.mxu0 0.0
        %848 = vmatprep.subr.mxu0 0.0
        %849 = vmatpush1.msra.mxu0 0.0
        %850 = vmatprep.subr.mxu0 0.0
        %851 = vmatpush1.msra.mxu0 0.0
        %852 = vmatprep.subr.mxu0 0.0
        %853 = vmatpush1.msra.mxu0 0.0
        %854 = vmatprep.mubr.f32.mxu0 0.0
        %855 = vmatmul.mubr.f32.gmra.mrb[0].mxu0 %v788
        %v856 = vpop.f32.mrb[0].mxu0
        %v857 = vadd.f32 0.0, %v856
        %v858 = vpop.f32.mrb[0].mxu0
        %859 = vdwg.mxu0
        %v860 = vadd.f32 %v783, %v857
        %861 = vst.msk [vmem:[%s776] sm:$0xff] %vm484, %v860
        %862 = vst.msk [vmem:[%s751] sm:$0xff] %vm583, %v756
        %v863 = vld [vmem:[#allocation2] sm:$0xff]
        %865 = vrot.lane.b32.xlu0 %v863, 112
        %v866 = vpop.permute.xlu0 %865
        %867 = vrot.lane.b32.xlu0 %v480, 112
        %v868 = vpop.permute.xlu0 %867
        %v869 = vsel %vm484, %v866, 0
        %v871 = vsel %vm484, %v868, 0
        %873 = vmatprep.subr.mxu0 0.0
        %874 = vmatpush1.xpose.msra.mxu0 %v871
        %875 = vmatprep.subr.mxu0 0.0
        %876 = vmatpush1.xpose.msra.mxu0 0.0
        %877 = vmatprep.subr.mxu0 0.0
        %878 = vmatpush1.xpose.msra.mxu0 0.0
        %879 = vmatprep.subr.mxu0 0.0
        %880 = vmatpush1.xpose.msra.mxu0 0.0
        %881 = vmatprep.subr.mxu0 0.0
        %882 = vmatpush1.xpose.msra.mxu0 0.0
        %883 = vmatprep.subr.mxu0 0.0
        %884 = vmatpush1.xpose.msra.mxu0 0.0
        %885 = vmatprep.subr.mxu0 0.0
        %886 = vmatpush1.xpose.msra.mxu0 0.0
        %887 = vmatprep.subr.mxu0 0.0
        %888 = vmatpush1.xpose.msra.mxu0 0.0
        %889 = vmatprep.subr.mxu0 0.0
        %890 = vmatpush1.xpose.msra.mxu0 0.0
        %891 = vmatprep.subr.mxu0 0.0
        %892 = vmatpush1.xpose.msra.mxu0 0.0
        %893 = vmatprep.subr.mxu0 0.0
        %894 = vmatpush1.xpose.msra.mxu0 0.0
        %895 = vmatprep.subr.mxu0 0.0
        %896 = vmatpush1.xpose.msra.mxu0 0.0
        %897 = vmatprep.subr.mxu0 0.0
        %898 = vmatpush1.xpose.msra.mxu0 0.0
        %899 = vmatprep.subr.mxu0 0.0
        %900 = vmatpush1.xpose.msra.mxu0 0.0
        %901 = vmatprep.subr.mxu0 0.0
        %902 = vmatpush1.xpose.msra.mxu0 0.0
        %903 = vmatprep.subr.mxu0 0.0
        %904 = vmatpush1.xpose.msra.mxu0 0.0
        %905 = vmatprep.subr.mxu0 0.0
        %906 = vmatpush1.xpose.msra.mxu0 0.0
        %907 = vmatprep.subr.mxu0 0.0
        %908 = vmatpush1.xpose.msra.mxu0 0.0
        %909 = vmatprep.subr.mxu0 0.0
        %910 = vmatpush1.xpose.msra.mxu0 0.0
        %911 = vmatprep.subr.mxu0 0.0
        %912 = vmatpush1.xpose.msra.mxu0 0.0
        %913 = vmatprep.subr.mxu0 0.0
        %914 = vmatpush1.xpose.msra.mxu0 0.0
        %915 = vmatprep.subr.mxu0 0.0
        %916 = vmatpush1.xpose.msra.mxu0 0.0
        %917 = vmatprep.subr.mxu0 0.0
        %918 = vmatpush1.xpose.msra.mxu0 0.0
        %919 = vmatprep.subr.mxu0 0.0
        %920 = vmatpush1.xpose.msra.mxu0 0.0
        %921 = vmatprep.subr.mxu0 0.0
        %922 = vmatpush1.xpose.msra.mxu0 0.0
        %923 = vmatprep.subr.mxu0 0.0
        %924 = vmatpush1.xpose.msra.mxu0 0.0
        %925 = vmatprep.subr.mxu0 0.0
        %926 = vmatpush1.xpose.msra.mxu0 0.0
        %927 = vmatprep.subr.mxu0 0.0
        %928 = vmatpush1.xpose.msra.mxu0 0.0
        %929 = vmatprep.subr.mxu0 0.0
        %930 = vmatpush1.xpose.msra.mxu0 0.0
        %931 = vmatprep.subr.mxu0 0.0
        %932 = vmatpush1.xpose.msra.mxu0 0.0
        %933 = vmatprep.subr.mxu0 0.0
        %934 = vmatpush1.xpose.msra.mxu0 0.0
        %935 = vmatprep.subr.mxu0 0.0
        %936 = vmatpush1.xpose.msra.mxu0 0.0
        %937 = vmatprep.mubr.f32.mxu0 0.0
        %938 = vmatmul.mubr.f32.gmra.mrb[0].mxu0 %v869
        %v939 = vpop.f32.mrb[0].mxu0
        %v940 = vadd.f32 0.0, %v939
        %v941 = vpop.f32.mrb[0].mxu0
        %942 = vdwg.mxu0
        %s943 = scalar_lea.vmem [#allocation3], 16
        %v944 = vld [vmem:[%s943] sm:$0xff]
        %v945 = vsel %vm484, %v940, -inf
        %946 = vmax.xlane.f32.xlu0 %v945
        %v947 = vpop.xlane.xlu0 %946
        %v948 = vmax.f32 %v944, %v947
        %v949 = vsub.f32 %v944, %v948
        %v950 = vmul.f32 %v949, 1.442695
        %v951 = vpow.pop %v950
        %953 = vset.pattern.permute.xlu0 0
        %954 = vperm.xlu0 %953, %v948
        %v955 = vpop.permute.xlu0 %954
        %v957 = vsub.f32 %v940, %v955
        %v958 = vmul.f32 %v957, 1.442695
        %v959 = vpow.pop %v958
        %s960 = scalar_lea.vmem [#allocation4], 16
        %v961 = vld [vmem:[%s960] sm:$0xff]
        %v962 = vmul.f32 %v951, %v961
        %v963 = vsel %vm484, %v959, 0.0
        %964 = vadd.xlane.f32.xlu0 %v963
        %v965 = vpop.xlane.xlu0 %964
        %v966 = vadd.f32 %v962, %v965
        %967 = vst.msk [vmem:[%s960] sm:$0xff] %vm583, %v966
        %s968 = scalar_lea.vmem [#allocation5], 16
        %v969 = vld [vmem:[%s968] sm:$0xff]
        %971 = vset.pattern.permute.xlu0 0
        %972 = vperm.xlu0 %971, %v951
        %v973 = vpop.permute.xlu0 %972
        %v975 = vmul.f32 %v973, %v969
        %976 = vrot.lane.b32.xlu0 %v480, 80
        %v977 = vpop.permute.xlu0 %976
        %v980 = vsel %vm484, %v959, 0
        %982 = vmatprep.subr.mxu0 0.0
        %983 = vmatpush1.msra.mxu0 %v977
        %984 = vmatprep.subr.mxu0 0.0
        %985 = vmatpush1.msra.mxu0 0.0
        %986 = vmatprep.subr.mxu0 0.0
        %987 = vmatpush1.msra.mxu0 0.0
        %988 = vmatprep.subr.mxu0 0.0
        %989 = vmatpush1.msra.mxu0 0.0
        %990 = vmatprep.subr.mxu0 0.0
        %991 = vmatpush1.msra.mxu0 0.0
        %992 = vmatprep.subr.mxu0 0.0
        %993 = vmatpush1.msra.mxu0 0.0
        %994 = vmatprep.subr.mxu0 0.0
        %995 = vmatpush1.msra.mxu0 0.0
        %996 = vmatprep.subr.mxu0 0.0
        %997 = vmatpush1.msra.mxu0 0.0
        %998 = vmatprep.subr.mxu0 0.0
        %999 = vmatpush1.msra.mxu0 0.0
        %1000 = vmatprep.subr.mxu0 0.0
        %1001 = vmatpush1.msra.mxu0 0.0
        %1002 = vmatprep.subr.mxu0 0.0
        %1003 = vmatpush1.msra.mxu0 0.0
        %1004 = vmatprep.subr.mxu0 0.0
        %1005 = vmatpush1.msra.mxu0 0.0
        %1006 = vmatprep.subr.mxu0 0.0
        %1007 = vmatpush1.msra.mxu0 0.0
        %1008 = vmatprep.subr.mxu0 0.0
        %1009 = vmatpush1.msra.mxu0 0.0
        %1010 = vmatprep.subr.mxu0 0.0
        %1011 = vmatpush1.msra.mxu0 0.0
        %1012 = vmatprep.subr.mxu0 0.0
        %1013 = vmatpush1.msra.mxu0 0.0
        %1014 = vmatprep.subr.mxu0 0.0
        %1015 = vmatpush1.msra.mxu0 0.0
        %1016 = vmatprep.subr.mxu0 0.0
        %1017 = vmatpush1.msra.mxu0 0.0
        %1018 = vmatprep.subr.mxu0 0.0
        %1019 = vmatpush1.msra.mxu0 0.0
        %1020 = vmatprep.subr.mxu0 0.0
        %1021 = vmatpush1.msra.mxu0 0.0
        %1022 = vmatprep.subr.mxu0 0.0
        %1023 = vmatpush1.msra.mxu0 0.0
        %1024 = vmatprep.subr.mxu0 0.0
        %1025 = vmatpush1.msra.mxu0 0.0
        %1026 = vmatprep.subr.mxu0 0.0
        %1027 = vmatpush1.msra.mxu0 0.0
        %1028 = vmatprep.subr.mxu0 0.0
        %1029 = vmatpush1.msra.mxu0 0.0
        %1030 = vmatprep.subr.mxu0 0.0
        %1031 = vmatpush1.msra.mxu0 0.0
        %1032 = vmatprep.subr.mxu0 0.0
        %1033 = vmatpush1.msra.mxu0 0.0
        %1034 = vmatprep.subr.mxu0 0.0
        %1035 = vmatpush1.msra.mxu0 0.0
        %1036 = vmatprep.subr.mxu0 0.0
        %1037 = vmatpush1.msra.mxu0 0.0
        %1038 = vmatprep.subr.mxu0 0.0
        %1039 = vmatpush1.msra.mxu0 0.0
        %1040 = vmatprep.subr.mxu0 0.0
        %1041 = vmatpush1.msra.mxu0 0.0
        %1042 = vmatprep.subr.mxu0 0.0
        %1043 = vmatpush1.msra.mxu0 0.0
        %1044 = vmatprep.subr.mxu0 0.0
        %1045 = vmatpush1.msra.mxu0 0.0
        %1046 = vmatprep.mubr.f32.mxu0 0.0
        %1047 = vmatmul.mubr.f32.gmra.mrb[0].mxu0 %v980
        %v1048 = vpop.f32.mrb[0].mxu0
        %v1049 = vadd.f32 0.0, %v1048
        %v1050 = vpop.f32.mrb[0].mxu0
        %1051 = vdwg.mxu0
        %v1052 = vadd.f32 %v975, %v1049
        %1053 = vst.msk [vmem:[%s968] sm:$0xff] %vm484, %v1052
        %1054 = vst.msk [vmem:[%s943] sm:$0xff] %vm583, %v948
        %v1055 = vld [vmem:[#allocation2] sm:$0xff]
        %1057 = vrot.lane.b32.xlu0 %v1055, 104
        %v1058 = vpop.permute.xlu0 %1057
        %1059 = vrot.lane.b32.xlu0 %v480, 104
        %v1060 = vpop.permute.xlu0 %1059
        %v1061 = vsel %vm484, %v1058, 0
        %v1063 = vsel %vm484, %v1060, 0
        %1065 = vmatprep.subr.mxu0 0.0
        %1066 = vmatpush1.xpose.msra.mxu0 %v1063
        %1067 = vmatprep.subr.mxu0 0.0
        %1068 = vmatpush1.xpose.msra.mxu0 0.0
        %1069 = vmatprep.subr.mxu0 0.0
        %1070 = vmatpush1.xpose.msra.mxu0 0.0
        %1071 = vmatprep.subr.mxu0 0.0
        %1072 = vmatpush1.xpose.msra.mxu0 0.0
        %1073 = vmatprep.subr.mxu0 0.0
        %1074 = vmatpush1.xpose.msra.mxu0 0.0
        %1075 = vmatprep.subr.mxu0 0.0
        %1076 = vmatpush1.xpose.msra.mxu0 0.0
        %1077 = vmatprep.subr.mxu0 0.0
        %1078 = vmatpush1.xpose.msra.mxu0 0.0
        %1079 = vmatprep.subr.mxu0 0.0
        %1080 = vmatpush1.xpose.msra.mxu0 0.0
        %1081 = vmatprep.subr.mxu0 0.0
        %1082 = vmatpush1.xpose.msra.mxu0 0.0
        %1083 = vmatprep.subr.mxu0 0.0
        %1084 = vmatpush1.xpose.msra.mxu0 0.0
        %1085 = vmatprep.subr.mxu0 0.0
        %1086 = vmatpush1.xpose.msra.mxu0 0.0
        %1087 = vmatprep.subr.mxu0 0.0
        %1088 = vmatpush1.xpose.msra.mxu0 0.0
        %1089 = vmatprep.subr.mxu0 0.0
        %1090 = vmatpush1.xpose.msra.mxu0 0.0
        %1091 = vmatprep.subr.mxu0 0.0
        %1092 = vmatpush1.xpose.msra.mxu0 0.0
        %1093 = vmatprep.subr.mxu0 0.0
        %1094 = vmatpush1.xpose.msra.mxu0 0.0
        %1095 = vmatprep.subr.mxu0 0.0
        %1096 = vmatpush1.xpose.msra.mxu0 0.0
        %1097 = vmatprep.subr.mxu0 0.0
        %1098 = vmatpush1.xpose.msra.mxu0 0.0
        %1099 = vmatprep.subr.mxu0 0.0
        %1100 = vmatpush1.xpose.msra.mxu0 0.0
        %1101 = vmatprep.subr.mxu0 0.0
        %1102 = vmatpush1.xpose.msra.mxu0 0.0
        %1103 = vmatprep.subr.mxu0 0.0
        %1104 = vmatpush1.xpose.msra.mxu0 0.0
        %1105 = vmatprep.subr.mxu0 0.0
        %1106 = vmatpush1.xpose.msra.mxu0 0.0
        %1107 = vmatprep.subr.mxu0 0.0
        %1108 = vmatpush1.xpose.msra.mxu0 0.0
        %1109 = vmatprep.subr.mxu0 0.0
        %1110 = vmatpush1.xpose.msra.mxu0 0.0
        %1111 = vmatprep.subr.mxu0 0.0
        %1112 = vmatpush1.xpose.msra.mxu0 0.0
        %1113 = vmatprep.subr.mxu0 0.0
        %1114 = vmatpush1.xpose.msra.mxu0 0.0
        %1115 = vmatprep.subr.mxu0 0.0
        %1116 = vmatpush1.xpose.msra.mxu0 0.0
        %1117 = vmatprep.subr.mxu0 0.0
        %1118 = vmatpush1.xpose.msra.mxu0 0.0
        %1119 = vmatprep.subr.mxu0 0.0
        %1120 = vmatpush1.xpose.msra.mxu0 0.0
        %1121 = vmatprep.subr.mxu0 0.0
        %1122 = vmatpush1.xpose.msra.mxu0 0.0
        %1123 = vmatprep.subr.mxu0 0.0
        %1124 = vmatpush1.xpose.msra.mxu0 0.0
        %1125 = vmatprep.subr.mxu0 0.0
        %1126 = vmatpush1.xpose.msra.mxu0 0.0
        %1127 = vmatprep.subr.mxu0 0.0
        %1128 = vmatpush1.xpose.msra.mxu0 0.0
        %1129 = vmatprep.mubr.f32.mxu0 0.0
        %1130 = vmatmul.mubr.f32.gmra.mrb[0].mxu0 %v1061
        %v1131 = vpop.f32.mrb[0].mxu0
        %v1132 = vadd.f32 0.0, %v1131
        %v1133 = vpop.f32.mrb[0].mxu0
        %1134 = vdwg.mxu0
        %s1135 = scalar_lea.vmem [#allocation3], 24
        %v1136 = vld [vmem:[%s1135] sm:$0xff]
        %v1137 = vsel %vm484, %v1132, -inf
        %1138 = vmax.xlane.f32.xlu0 %v1137
        %v1139 = vpop.xlane.xlu0 %1138
        %v1140 = vmax.f32 %v1136, %v1139
        %v1141 = vsub.f32 %v1136, %v1140
        %v1142 = vmul.f32 %v1141, 1.442695
        %v1143 = vpow.pop %v1142
        %1145 = vset.pattern.permute.xlu0 0
        %1146 = vperm.xlu0 %1145, %v1140
        %v1147 = vpop.permute.xlu0 %1146
        %v1149 = vsub.f32 %v1132, %v1147
        %v1150 = vmul.f32 %v1149, 1.442695
        %v1151 = vpow.pop %v1150
        %s1152 = scalar_lea.vmem [#allocation4], 24
        %v1153 = vld [vmem:[%s1152] sm:$0xff]
        %v1154 = vmul.f32 %v1143, %v1153
        %v1155 = vsel %vm484, %v1151, 0.0
        %1156 = vadd.xlane.f32.xlu0 %v1155
        %v1157 = vpop.xlane.xlu0 %1156
        %v1158 = vadd.f32 %v1154, %v1157
        %1159 = vst.msk [vmem:[%s1152] sm:$0xff] %vm583, %v1158
        %s1160 = scalar_lea.vmem [#allocation5], 24
        %v1161 = vld [vmem:[%s1160] sm:$0xff]
        %1163 = vset.pattern.permute.xlu0 0
        %1164 = vperm.xlu0 %1163, %v1143
        %v1165 = vpop.permute.xlu0 %1164
        %v1167 = vmul.f32 %v1165, %v1161
        %1168 = vrot.lane.b32.xlu0 %v480, 72
        %v1169 = vpop.permute.xlu0 %1168
        %v1172 = vsel %vm484, %v1151, 0
        %1174 = vmatprep.subr.mxu0 0.0
        %1175 = vmatpush1.msra.mxu0 %v1169
        %1176 = vmatprep.subr.mxu0 0.0
        %1177 = vmatpush1.msra.mxu0 0.0
        %1178 = vmatprep.subr.mxu0 0.0
        %1179 = vmatpush1.msra.mxu0 0.0
        %1180 = vmatprep.subr.mxu0 0.0
        %1181 = vmatpush1.msra.mxu0 0.0
        %1182 = vmatprep.subr.mxu0 0.0
        %1183 = vmatpush1.msra.mxu0 0.0
        %1184 = vmatprep.subr.mxu0 0.0
        %1185 = vmatpush1.msra.mxu0 0.0
        %1186 = vmatprep.subr.mxu0 0.0
        %1187 = vmatpush1.msra.mxu0 0.0
        %1188 = vmatprep.subr.mxu0 0.0
        %1189 = vmatpush1.msra.mxu0 0.0
        %1190 = vmatprep.subr.mxu0 0.0
        %1191 = vmatpush1.msra.mxu0 0.0
        %1192 = vmatprep.subr.mxu0 0.0
        %1193 = vmatpush1.msra.mxu0 0.0
        %1194 = vmatprep.subr.mxu0 0.0
        %1195 = vmatpush1.msra.mxu0 0.0
        %1196 = vmatprep.subr.mxu0 0.0
        %1197 = vmatpush1.msra.mxu0 0.0
        %1198 = vmatprep.subr.mxu0 0.0
        %1199 = vmatpush1.msra.mxu0 0.0
        %1200 = vmatprep.subr.mxu0 0.0
        %1201 = vmatpush1.msra.mxu0 0.0
        %1202 = vmatprep.subr.mxu0 0.0
        %1203 = vmatpush1.msra.mxu0 0.0
        %1204 = vmatprep.subr.mxu0 0.0
        %1205 = vmatpush1.msra.mxu0 0.0
        %1206 = vmatprep.subr.mxu0 0.0
        %1207 = vmatpush1.msra.mxu0 0.0
        %1208 = vmatprep.subr.mxu0 0.0
        %1209 = vmatpush1.msra.mxu0 0.0
        %1210 = vmatprep.subr.mxu0 0.0
        %1211 = vmatpush1.msra.mxu0 0.0
        %1212 = vmatprep.subr.mxu0 0.0
        %1213 = vmatpush1.msra.mxu0 0.0
        %1214 = vmatprep.subr.mxu0 0.0
        %1215 = vmatpush1.msra.mxu0 0.0
        %1216 = vmatprep.subr.mxu0 0.0
        %1217 = vmatpush1.msra.mxu0 0.0
        %1218 = vmatprep.subr.mxu0 0.0
        %1219 = vmatpush1.msra.mxu0 0.0
        %1220 = vmatprep.subr.mxu0 0.0
        %1221 = vmatpush1.msra.mxu0 0.0
        %1222 = vmatprep.subr.mxu0 0.0
        %1223 = vmatpush1.msra.mxu0 0.0
        %1224 = vmatprep.subr.mxu0 0.0
        %1225 = vmatpush1.msra.mxu0 0.0
        %1226 = vmatprep.subr.mxu0 0.0
        %1227 = vmatpush1.msra.mxu0 0.0
        %1228 = vmatprep.subr.mxu0 0.0
        %1229 = vmatpush1.msra.mxu0 0.0
        %1230 = vmatprep.subr.mxu0 0.0
        %1231 = vmatpush1.msra.mxu0 0.0
        %1232 = vmatprep.subr.mxu0 0.0
        %1233 = vmatpush1.msra.mxu0 0.0
        %1234 = vmatprep.subr.mxu0 0.0
        %1235 = vmatpush1.msra.mxu0 0.0
        %1236 = vmatprep.subr.mxu0 0.0
        %1237 = vmatpush1.msra.mxu0 0.0
        %1238 = vmatprep.mubr.f32.mxu0 0.0
        %1239 = vmatmul.mubr.f32.gmra.mrb[0].mxu0 %v1172
        %v1240 = vpop.f32.mrb[0].mxu0
        %v1241 = vadd.f32 0.0, %v1240
        %v1242 = vpop.f32.mrb[0].mxu0
        %1243 = vdwg.mxu0
        %v1244 = vadd.f32 %v1167, %v1241
        %1245 = vst.msk [vmem:[%s1160] sm:$0xff] %vm484, %v1244
        %1246 = vst.msk [vmem:[%s1135] sm:$0xff] %vm583, %v1140
        // Predicated region
        $region57: #{tpu_custom_call.1} parent=35 // pred_check
          %p1247 = pneg %p306
        $region58: #{tpu_custom_call.1} parent=35 // pred_check_branch
          %1249 = sbr.rel (%p1247) target = $region60
        $region59: #{tpu_custom_call.1} parent=35 // pred_region
          %v1250 = vld [vmem:[#allocation4] sm:$0xff]
          %v1251 = vld [vmem:[#allocation4 + $0x8] sm:$0xff]
          %v1252 = vld [vmem:[#allocation4 + $0x10] sm:$0xff]
          %v1253 = vld [vmem:[#allocation4 + $0x18] sm:$0xff]
          %v1254 = vrcp.pop %v1250
          %v1255 = vrcp.pop %v1251
          %v1256 = vrcp.pop %v1252
          %v1257 = vrcp.pop %v1253
          %v1258 = vld [vmem:[#allocation5] sm:$0xff]
          %v1259 = vld [vmem:[#allocation5 + $0x8] sm:$0xff]
          %v1260 = vld [vmem:[#allocation5 + $0x10] sm:$0xff]
          %v1261 = vld [vmem:[#allocation5 + $0x18] sm:$0xff]
          %1263 = vset.pattern.permute.xlu0 0
          %1264 = vperm.xlu0 %1263, %v1254
          %v1265 = vpop.permute.xlu0 %1264
          %1268 = vset.pattern.permute.xlu0 0
          %1269 = vperm.xlu0 %1268, %v1255
          %v1270 = vpop.permute.xlu0 %1269
          %1273 = vset.pattern.permute.xlu0 0
          %1274 = vperm.xlu0 %1273, %v1256
          %v1275 = vpop.permute.xlu0 %1274
          %1278 = vset.pattern.permute.xlu0 0
          %1279 = vperm.xlu0 %1278, %v1257
          %v1280 = vpop.permute.xlu0 %1279
          %v1282 = vmul.f32 %v1258, %v1265
          %v1283 = vmul.f32 %v1259, %v1270
          %v1284 = vmul.f32 %v1260, %v1275
          %v1285 = vmul.f32 %v1261, %v1280
          %1287 = vrot.lane.b32.xlu0 %v1283, 8
          %v1288 = vpop.permute.xlu0 %1287
          %1291 = vrot.lane.b32.xlu0 %v1284, 16
          %v1292 = vpop.permute.xlu0 %1291
          %1295 = vrot.lane.b32.xlu0 %v1285, 24
          %v1296 = vpop.permute.xlu0 %1295
          %v1298 = vsel %vm484, %v1282, %v1288
          %vm1299 = vcmask 130048
          %v1300 = vsel %vm1299, %v1298, %v1292
          %vm1301 = vcmask 195584
          %v1302 = vsel %vm1301, %v1300, %v1296
          %1303 = vst.msk [vmem:[%s305] sm:$0xff] %vm409, %v1302
        $region60: #{tpu_custom_call.1} parent=35 // pred_fallthru
          _
        %s1304 = sand.u32 %s152, 1
        %s1305 = scalar_lea.sflag [#allocation8], %s1304
        %s1306 = sand.u32 %s152, 1
        %s1307 = smul.addr %s1306, 8
        %s1308 = scalar_lea.vmem [#allocation14], %s1307
        // Predicated region
        $region61: #{tpu_custom_call.1} parent=35 // pred_check
          %p1309 = pneg %p162
        $region62: #{tpu_custom_call.1} parent=35 // pred_check_branch
          %1311 = sbr.rel (%p1309) target = $region64
        $region63: #{tpu_custom_call.1} parent=35 // pred_region
          %s1313 = ssub.s32 128, 128
          %1314 = vsyncadd %s1305, %s1313
          %s1315 = sadd.s32 %s31, %s30
          %s1316 = smul.addr %s1315, 128
          %s1317 = scalar_lea.hbm %s4, %s1316
          %s1319 = sshll.u32 %s1308, 4
          %s1320 = int_to_ptr.vmem [resolvable:$true] %s1319
          %1322 = dma.vmem_to_hbm [thread:$0]  %s1320, 128, %s1317, %s1305
        $region64: #{tpu_custom_call.1} parent=35 // pred_fallthru
          _
      $region36: #{tpu_custom_call.1} parent=5 // pred_fallthru
        _
      %p1323 = scmp.le.s32.totalorder 2, %s20
      // Predicated region
      $region65: #{tpu_custom_call.1} parent=5 // pred_check
        %p1324 = pneg %p1323
      $region66: #{tpu_custom_call.1} parent=5 // pred_check_branch
        %1326 = sbr.rel (%p1324) target = $region68
      $region67: #{tpu_custom_call.1} parent=5 // pred_region
        %s1327 = ssub.s32 %s20, 2
        // Predicated region
        $region69: #{tpu_custom_call.1} parent=67 // pred_check
          %p1328 = pneg %p168
        $region70: #{tpu_custom_call.1} parent=67 // pred_check_branch
          %1330 = sbr.rel (%p1328) target = $region72
        $region71: #{tpu_custom_call.1} parent=67 // pred_region
          %s1331 = sand.u32 %s153, 1
          %s1332 = scalar_lea.sflag [#allocation8], %s1331
          %s1333 = sand.u32 %s153, 1
          %s1334 = smul.addr %s1333, 8
          %s1335 = scalar_lea.vmem [#allocation14], %s1334
          %1336 = dma.done %s1332, 128
        $region72: #{tpu_custom_call.1} parent=67 // pred_fallthru
          _
      $region68: #{tpu_custom_call.1} parent=5 // pred_fallthru
        _
    $region6: #{tpu_custom_call.1} parent=1 // loop_footer
      %s24 = sadd.s32 1, %s20
    $region7: #{tpu_custom_call.1} parent=1 // loop_footer_branch
      %19 = sbr.rel target = $region3
    $region8: #{tpu_custom_call.1} parent=1 // loop_exit
      _
    %1337 = vsyncpa [#allocation7], 1
    %s1338 = scalar_lea.sflag [#allocation7], 1
    %1339 = vsyncpa %s1338, 1
    %1340 = vsyncpa [#allocation10], 1
    %s1341 = scalar_lea.sflag [#allocation10], 1
    %1342 = vsyncpa %s1341, 1
    %1343 = vsyncpa [#allocation13], 1
    %1344 = vsyncpa [#allocation8], 1
    %s1345 = scalar_lea.sflag [#allocation8], 1
    %1346 = vsyncpa %s1345, 1

</llo_original>
